<compile_context>
chip_gen: v7x
topology: tpu7x:2x2x1
jax: 0.10.0
libtpu: 0.0.40
codegen_flags: <defaults>
</compile_context>

<pallas_src>
import functools
import math

import jax
import jax.numpy as jnp
from jax.experimental import pallas as pl
from jax.experimental.pallas import tpu as pltpu


# ----------------------------- tiling helper -----------------------------

def _pick_tile(dim, pref, align):
    """Largest tile <= pref that is a multiple of `align` and divides `dim`;
    falls back to the full dimension (always legal for BlockSpec)."""
    if dim <= pref:
        return dim
    t = (min(pref, dim) // align) * align
    while t >= align:
        if dim % t == 0:
            return t
        t -= align
    return dim


# ----------------------------- Pallas kernels -----------------------------

def _linear_kernel(x_ref, w_ref, b_ref, o_ref, acc_ref, *, activation):
    k = pl.program_id(2)

    @pl.when(k == 0)
    def _():
        acc_ref[...] = jnp.zeros_like(acc_ref)

    acc_ref[...] += jnp.dot(x_ref[...], w_ref[...],
                            preferred_element_type=jnp.float32)

    @pl.when(k == pl.num_programs(2) - 1)
    def _():
        y = acc_ref[...] + b_ref[...]
        if activation == "gelu":
            # tanh approximation of BERT's erf-based GELU (f32 math, EUP tanh).
            c = math.sqrt(2.0 / math.pi)
            y = 0.5 * y * (1.0 + jnp.tanh(c * (y + 0.044715 * y * y * y)))
        o_ref[...] = y.astype(o_ref.dtype)


def linear(x, w, b, activation=None, out_dtype=jnp.bfloat16,
           tm=256, tn=256, tk=512):
    """Tiled GEMM + bias (+ optional GELU). bf16 inputs, f32 accumulation."""
    M, K = x.shape
    N = w.shape[1]
    tm = _pick_tile(M, tm, 8)
    tn = _pick_tile(N, tn, 128)
    tk = _pick_tile(K, tk, 128)
    grid = (M // tm, N // tn, K // tk)
    return pl.pallas_call(
        functools.partial(_linear_kernel, activation=activation),
        out_shape=jax.ShapeDtypeStruct((M, N), out_dtype),
        grid=grid,
        in_specs=[pl.BlockSpec((tm, tk), lambda i, j, k: (i, k)),
                  pl.BlockSpec((tk, tn), lambda i, j, k: (k, j)),
                  pl.BlockSpec((1, tn), lambda i, j, k: (0, j))],
        out_specs=pl.BlockSpec((tm, tn), lambda i, j, k: (i, j)),
        scratch_shapes=[pltpu.VMEM((tm, tn), jnp.float32)],
        compiler_params=pltpu.CompilerParams(
            dimension_semantics=("parallel", "parallel", "arbitrary")),
    )(x, w, b.reshape(1, N))


def _linear_ln_kernel(x_ref, w_ref, b_ref, r_ref, g_ref, be_ref,
                      o_ref, acc_ref, *, eps):
    k = pl.program_id(2)

    @pl.when(k == 0)
    def _():
        acc_ref[...] = jnp.zeros_like(acc_ref)

    acc_ref[...] += jnp.dot(x_ref[...], w_ref[...],
                            preferred_element_type=jnp.float32)

    @pl.when(k == pl.num_programs(2) - 1)
    def _():
        # residual add + LayerNorm fused into the GEMM epilogue (f32 math).
        y = acc_ref[...] + b_ref[...] + r_ref[...].astype(jnp.float32)
        mu = jnp.mean(y, axis=-1, keepdims=True)
        var = jnp.mean(jnp.square(y - mu), axis=-1, keepdims=True)
        inv = jax.lax.rsqrt(var + eps)
        o_ref[...] = ((y - mu) * inv * g_ref[...] + be_ref[...]).astype(o_ref.dtype)


def linear_ln(x, w, b, residual, gamma, beta, eps=1e-12,
              out_dtype=jnp.bfloat16, tm=256, tk=512):
    """Tiled GEMM whose epilogue does bias + residual-add + LayerNorm.
    The N axis is kept whole (tn = N) so the full row is resident for LN."""
    M, K = x.shape
    N = w.shape[1]
    tm = _pick_tile(M, tm, 8)
    tk = _pick_tile(K, tk, 128)
    tn = N
    grid = (M // tm, 1, K // tk)
    return pl.pallas_call(
        functools.partial(_linear_ln_kernel, eps=eps),
        out_shape=jax.ShapeDtypeStruct((M, N), out_dtype),
        grid=grid,
        in_specs=[pl.BlockSpec((tm, tk), lambda i, j, k: (i, k)),
                  pl.BlockSpec((tk, tn), lambda i, j, k: (k, j)),
                  pl.BlockSpec((1, tn), lambda i, j, k: (0, j)),
                  pl.BlockSpec((tm, tn), lambda i, j, k: (i, j)),
                  pl.BlockSpec((1, tn), lambda i, j, k: (0, j)),
                  pl.BlockSpec((1, tn), lambda i, j, k: (0, j))],
        out_specs=pl.BlockSpec((tm, tn), lambda i, j, k: (i, j)),
        scratch_shapes=[pltpu.VMEM((tm, tn), jnp.float32)],
        compiler_params=pltpu.CompilerParams(
            dimension_semantics=("parallel", "parallel", "arbitrary")),
    )(x, w, b.reshape(1, N), residual, gamma.reshape(1, N), beta.reshape(1, N))


def _ln_kernel(x_ref, g_ref, b_ref, o_ref, *, eps):
    x = x_ref[...].astype(jnp.float32)
    mu = jnp.mean(x, axis=-1, keepdims=True)
    var = jnp.mean(jnp.square(x - mu), axis=-1, keepdims=True)
    inv = jax.lax.rsqrt(var + eps)
    o_ref[...] = ((x - mu) * inv * g_ref[...] + b_ref[...]).astype(o_ref.dtype)


def layernorm(x, gamma, beta, eps=1e-12, out_dtype=jnp.bfloat16, tm=256):
    """Row-tiled LayerNorm with no residual (used after the embedding sum)."""
    M, H = x.shape
    tm = _pick_tile(M, tm, 8)
    return pl.pallas_call(
        functools.partial(_ln_kernel, eps=eps),
        out_shape=jax.ShapeDtypeStruct((M, H), out_dtype),
        grid=(M // tm,),
        in_specs=[pl.BlockSpec((tm, H), lambda i: (i, 0)),
                  pl.BlockSpec((1, H), lambda i: (0, 0)),
                  pl.BlockSpec((1, H), lambda i: (0, 0))],
        out_specs=pl.BlockSpec((tm, H), lambda i: (i, 0)),
        compiler_params=pltpu.CompilerParams(
            dimension_semantics=("parallel",)),
    )(x, gamma.reshape(1, H), beta.reshape(1, H))


def _attention_kernel(q_ref, k_ref, v_ref, m_ref, o_ref, *,
                      scale, heads_per_block, d_head):
    # q/k/v/o blocks are [1, S, heads_per_block*d_head]; mask is [1, 1, S].
    mask = m_ref[0]                                            # [1, S] f32
    outs = []
    for h in range(heads_per_block):
        lo = h * d_head
        # fold the softmax scale into q (S*dH mults instead of S*S)
        q = q_ref[0, :, lo:lo + d_head] * jnp.bfloat16(scale)  # [S, dH] bf16
        k = k_ref[0, :, lo:lo + d_head]
        v = v_ref[0, :, lo:lo + d_head]
        # q @ k^T via dot_general contracting last dims (no explicit transpose)
        s = jax.lax.dot_general(q, k, (((1,), (1,)), ((), ())),
                                preferred_element_type=jnp.float32)
        s = s + mask                                           # [S, S] f32
        s = s - jnp.max(s, axis=-1, keepdims=True)
        p = jnp.exp(s)
        p = p * pl.reciprocal(jnp.sum(p, axis=-1, keepdims=True), approx=True)
        outs.append(jnp.dot(p.astype(v.dtype), v,
                            preferred_element_type=jnp.float32))
    # single lane-dense store of the whole head-group block
    o_ref[0] = jnp.concatenate(outs, axis=-1).astype(o_ref.dtype)


def attention(q, k, v, add_mask, num_heads):
    """Multi-head attention directly on [B, S, H]; grid over (batch, head-group)
    with the head-group chosen so the block's last dim is lane-dense (>=128)."""
    B, S, H = q.shape
    d_head = H // num_heads
    heads_per_block = num_heads
    for cand in range(1, num_heads + 1):
        if num_heads % cand == 0 and cand * d_head >= 128:
            heads_per_block = cand
            break
    blk = heads_per_block * d_head
    m3 = add_mask.reshape(B, 1, S).astype(jnp.float32)
    spec = pl.BlockSpec((1, S, blk), lambda b, g: (b, 0, g))
    # TODO(synk): for long sequences (S >= 1-2K) switch to a flash-style
    # KV-tiled online-softmax so the S x S score matrix never materializes.
    return pl.pallas_call(
        functools.partial(_attention_kernel, scale=1.0 / math.sqrt(d_head),
                          heads_per_block=heads_per_block, d_head=d_head),
        out_shape=jax.ShapeDtypeStruct((B, S, H), q.dtype),
        grid=(B, num_heads // heads_per_block),
        in_specs=[spec, spec, spec,
                  pl.BlockSpec((1, 1, S), lambda b, g: (b, 0, 0))],
        out_specs=spec,
        compiler_params=pltpu.CompilerParams(
            dimension_semantics=("parallel", "parallel")),
    )(q, k, v, m3)


def _span_concat_kernel(enc_ref, st_ref, en_ref, o_ref):
    H = enc_ref.shape[2]
    enc = enc_ref[0]                                            # [S, H]
    sv = jnp.dot(st_ref[0], enc, preferred_element_type=jnp.float32)   # [N, H]
    ev = jnp.dot(en_ref[0], enc, preferred_element_type=jnp.float32)   # [N, H]
    o_ref[0, :, :H] = sv.astype(o_ref.dtype)
    o_ref[0, :, H:] = ev.astype(o_ref.dtype)


def span_concat(enc, start_index, end_index):
    # start_vectors = start_index @ enc ; end_vectors = end_index @ enc
    # (equivalent to the permute/bmm/permute dance in the PyTorch forward)
    B, S, H = enc.shape
    N = start_index.shape[1]
    return pl.pallas_call(
        _span_concat_kernel,
        out_shape=jax.ShapeDtypeStruct((B, N, 2 * H), jnp.float32),
        grid=(B,),
        in_specs=[pl.BlockSpec((1, S, H), lambda b: (b, 0, 0)),
                  pl.BlockSpec((1, N, S), lambda b: (b, 0, 0)),
                  pl.BlockSpec((1, N, S), lambda b: (b, 0, 0))],
        out_specs=pl.BlockSpec((1, N, 2 * H), lambda b: (b, 0, 0)),
        compiler_params=pltpu.CompilerParams(
            dimension_semantics=("parallel",)),
    )(enc, start_index, end_index)


# ----------------------------- parameter init -----------------------------

def init_params(key, *, vocab, type_vocab, max_pos, H, I, L):
    keys = jax.random.split(key, 4 + 6 * L)

    def w(k, shape, dtype=jnp.bfloat16):
        return (jax.random.normal(k, shape, jnp.float32) * 0.02).astype(dtype)

    params = dict(
        word_emb=w(keys[0], (vocab, H), jnp.float32),
        pos_emb=w(keys[1], (max_pos, H), jnp.float32),
        type_emb=w(keys[2], (type_vocab, H), jnp.float32),
        emb_ln_g=jnp.ones((H,), jnp.float32),
        emb_ln_b=jnp.zeros((H,), jnp.float32),
        # fc_1 is declared by the module (2H -> H) but never used in forward.
        fc1_w=w(keys[3], (2 * H, H)),
        fc1_b=jnp.zeros((H,), jnp.float32),
        layers=[],
    )
    ki = 4
    for _ in range(L):
        wq = w(keys[ki + 0], (H, H))
        wk = w(keys[ki + 1], (H, H))
        wv = w(keys[ki + 2], (H, H))
        params["layers"].append(dict(
            wqkv=jnp.concatenate([wq, wk, wv], axis=1),     # fused QKV [H, 3H]
            bqkv=jnp.zeros((3 * H,), jnp.float32),
            wo=w(keys[ki + 3], (H, H)), bo=jnp.zeros((H,), jnp.float32),
            ln1_g=jnp.ones((H,), jnp.float32), ln1_b=jnp.zeros((H,), jnp.float32),
            w1=w(keys[ki + 4], (H, I)), b1=jnp.zeros((I,), jnp.float32),
            w2=w(keys[ki + 5], (I, H)), b2=jnp.zeros((H,), jnp.float32),
            ln2_g=jnp.ones((H,), jnp.float32), ln2_b=jnp.zeros((H,), jnp.float32),
        ))
        ki += 6
    return params


# ----------------------------- forward pass -----------------------------

def forward(params, sequences, segment_id, start_index, end_index, *, num_heads):
    B, S = sequences.shape
    H = params["word_emb"].shape[1]

    # construct_binary_mask: 1 for real tokens, 0 for padding (index 0);
    # BertModel internally turns it into an additive mask (1 - m) * -10000.
    binary_mask = (sequences != 0).astype(jnp.float32)
    add_mask = (1.0 - binary_mask) * -10000.0                 # [B, S]

    # Embeddings (gathers are glue, summed in f32), LayerNorm in Pallas -> bf16.
    pos = jnp.arange(S, dtype=jnp.int32)
    x = (params["word_emb"][sequences]
         + params["pos_emb"][pos][None, :, :]
         + params["type_emb"][segment_id])                    # [B, S, H] f32
    x2 = layernorm(x.reshape(B * S, H),
                   params["emb_ln_g"], params["emb_ln_b"])    # [B*S, H] bf16

    for layer in params["layers"]:
        qkv = linear(x2, layer["wqkv"], layer["bqkv"])        # [B*S, 3H] bf16
        q = qkv[:, :H].reshape(B, S, H)
        k = qkv[:, H:2 * H].reshape(B, S, H)
        v = qkv[:, 2 * H:].reshape(B, S, H)
        ctx = attention(q, k, v, add_mask, num_heads).reshape(B * S, H)
        # attention-output projection with fused residual-add + LayerNorm
        x2 = linear_ln(ctx, layer["wo"], layer["bo"],
                       x2, layer["ln1_g"], layer["ln1_b"])
        inter = linear(x2, layer["w1"], layer["b1"], activation="gelu")
        # FFN-output projection with fused residual-add + LayerNorm
        x2 = linear_ln(inter, layer["w2"], layer["b2"],
                       x2, layer["ln2_g"], layer["ln2_b"])

    enc = x2.reshape(B, S, H)                                 # paragraph_encoding
    out = span_concat(enc,
                      start_index.astype(jnp.bfloat16),
                      end_index.astype(jnp.bfloat16))         # [B, N, 2H] f32
    # nn.Dropout is identity at inference (eval mode).
    # TODO(synk): training-mode dropout masking not implemented.
    return out


# jit the whole forward so the glue ops (gathers, reshapes, slices) between
# Pallas calls are fused by XLA and Python dispatch overhead disappears.
forward_jit = jax.jit(forward, static_argnames=("num_heads",))


# ----------------------------- demo -----------------------------

if __name__ == "__main__":
    B, S, H, nH, I, L = 2, 8, 32, 4, 64, 2
    vocab, type_vocab, max_pos, N = 50, 2, 16, 3

    key = jax.random.PRNGKey(0)
    kp, ks, kst, ken = jax.random.split(key, 4)

    params = init_params(kp, vocab=vocab, type_vocab=type_vocab,
                         max_pos=max_pos, H=H, I=I, L=L)

    sequences = jax.random.randint(ks, (B, S), 1, vocab).astype(jnp.int32)
    sequences = sequences.at[:, -2:].set(0)                   # padding tokens
    segment_id = jnp.concatenate(
        [jnp.zeros((B, S // 2), jnp.int32), jnp.ones((B, S - S // 2), jnp.int32)],
        axis=1)
    start_pos = jax.random.randint(kst, (B, N), 0, S - 2)
    end_pos = jax.random.randint(ken, (B, N), 0, S - 2)
    start_index = jax.nn.one_hot(start_pos, S, dtype=jnp.float32)  # [B, N, S]
    end_index = jax.nn.one_hot(end_pos, S, dtype=jnp.float32)      # [B, N, S]

    out = forward_jit(params, sequences, segment_id, start_index, end_index,
                      num_heads=nH)
    out = jax.block_until_ready(out)
    assert out.shape == (B, N, 2 * H) and out.dtype == jnp.float32
    assert bool(jnp.all(jnp.isfinite(out)))
    print("KERNEL_OK")
</pallas_src>

<mosaic_0001>
module attributes {stable_mosaic.version = 11 : i64} {
  func.func @_linear_kernel(%arg0: i32, %arg1: i32, %arg2: i32, %arg3: memref<16x32xbf16, #tpu.memory_space<vmem>>, %arg4: memref<32x96xbf16, #tpu.memory_space<vmem>>, %arg5: memref<1x96xf32, #tpu.memory_space<vmem>>, %arg6: memref<16x96xbf16, #tpu.memory_space<vmem>>, %arg7: memref<16x96xf32, #tpu.memory_space<vmem>>) attributes {dimension_semantics = [#tpu.dimension_semantics<parallel>, #tpu.dimension_semantics<parallel>, #tpu.dimension_semantics<arbitrary>], iteration_bounds = array<i64: 1, 1, 1>, scalar_prefetch = 0 : i64, scratch_operands = 1 : i64, tpu.core_type = #tpu.core_type<tc>, window_params = [{transform_indices = @transform_0, window_bounds = array<i64: 16, 32>}, {transform_indices = @transform_1, window_bounds = array<i64: 32, 96>}, {transform_indices = @transform_2, window_bounds = array<i64: 1, 96>}, {transform_indices = @transform_3, window_bounds = array<i64: 16, 96>}]} {
    %c0_i32 = arith.constant 0 : i32
    %0 = arith.cmpi eq, %arg2, %c0_i32 : i32
    %1 = arith.extui %0 : i1 to i32
    %c0_i32_0 = arith.constant 0 : i32
    %2 = arith.cmpi ne, %1, %c0_i32_0 : i32
    scf.if %2 {
      %cst_10 = arith.constant 0.000000e+00 : f32
      %12 = vector.broadcast %cst_10 : f32 to vector<16x96xf32>
      %c0_11 = arith.constant 0 : index
      %c0_12 = arith.constant 0 : index
      %13 = vector.load %arg7[%c0_11, %c0_12] : memref<16x96xf32, #tpu.memory_space<vmem>>, vector<16x96xf32>
      tpu.vector_store %arg7[%c0_11, %c0_12], %12 {strides = array<i32>} : memref<16x96xf32, #tpu.memory_space<vmem>>, vector<16x96xf32>,
    } else {
    }
    %c0 = arith.constant 0 : index
    %c0_1 = arith.constant 0 : index
    %3 = vector.load %arg7[%c0, %c0_1] : memref<16x96xf32, #tpu.memory_space<vmem>>, vector<16x96xf32>
    %c0_2 = arith.constant 0 : index
    %c0_3 = arith.constant 0 : index
    %4 = vector.load %arg3[%c0_2, %c0_3] : memref<16x32xbf16, #tpu.memory_space<vmem>>, vector<16x32xbf16>
    %c0_4 = arith.constant 0 : index
    %c0_5 = arith.constant 0 : index
    %5 = vector.load %arg4[%c0_4, %c0_5] : memref<32x96xbf16, #tpu.memory_space<vmem>>, vector<32x96xbf16>
    %cst = arith.constant dense<0.000000e+00> : vector<16x96xf32>
    %6 = tpu.matmul %4, %5, %cst {dimension_numbers = #tpu.dot_dimension_numbers<[1], [0], [0], [1], [0, 0, 1, 1], [], []>} : vector<16x32xbf16>, vector<32x96xbf16>, vector<16x96xf32> -> vector<16x96xf32>
    %7 = arith.addf %3, %6 : vector<16x96xf32>
    %c0_6 = arith.constant 0 : index
    %c0_7 = arith.constant 0 : index
    %8 = vector.load %arg7[%c0_6, %c0_7] : memref<16x96xf32, #tpu.memory_space<vmem>>, vector<16x96xf32>
    tpu.vector_store %arg7[%c0_6, %c0_7], %7 {strides = array<i32>} : memref<16x96xf32, #tpu.memory_space<vmem>>, vector<16x96xf32>,
    %c0_i32_8 = arith.constant 0 : i32
    %9 = arith.cmpi eq, %arg2, %c0_i32_8 : i32
    %10 = arith.extui %9 : i1 to i32
    %c0_i32_9 = arith.constant 0 : i32
    %11 = arith.cmpi ne, %10, %c0_i32_9 : i32
    scf.if %11 {
      %c0_10 = arith.constant 0 : index
      %c0_11 = arith.constant 0 : index
      %12 = vector.load %arg7[%c0_10, %c0_11] : memref<16x96xf32, #tpu.memory_space<vmem>>, vector<16x96xf32>
      %c0_12 = arith.constant 0 : index
      %c0_13 = arith.constant 0 : index
      %13 = vector.load %arg5[%c0_12, %c0_13] : memref<1x96xf32, #tpu.memory_space<vmem>>, vector<1x96xf32>
      %14 = vector.broadcast %13 : vector<1x96xf32> to vector<16x96xf32>
      %15 = arith.addf %12, %14 : vector<16x96xf32>
      %16 = arith.truncf %15 : vector<16x96xf32> to vector<16x96xbf16>
      %c0_14 = arith.constant 0 : index
      %c0_15 = arith.constant 0 : index
      %17 = vector.load %arg6[%c0_14, %c0_15] : memref<16x96xbf16, #tpu.memory_space<vmem>>, vector<16x96xbf16>
      tpu.vector_store %arg6[%c0_14, %c0_15], %16 {strides = array<i32>} : memref<16x96xbf16, #tpu.memory_space<vmem>>, vector<16x96xbf16>,
    } else {
    }
    return
  }
  func.func @transform_0(%arg0: i32, %arg1: i32, %arg2: i32) -> (i32, i32) {
    %c0_i32 = arith.constant 0 : i32
    return %arg0, %arg2 : i32, i32
  }
  func.func @transform_1(%arg0: i32, %arg1: i32, %arg2: i32) -> (i32, i32) {
    %c0_i32 = arith.constant 0 : i32
    return %arg2, %arg1 : i32, i32
  }
  func.func @transform_2(%arg0: i32, %arg1: i32, %arg2: i32) -> (i32, i32) {
    %c0_i32 = arith.constant 0 : i32
    %c0_i32_0 = arith.constant 0 : i32
    return %c0_i32, %arg1 : i32, i32
  }
  func.func @transform_3(%arg0: i32, %arg1: i32, %arg2: i32) -> (i32, i32) {
    %c0_i32 = arith.constant 0 : i32
    return %arg0, %arg1 : i32, i32
  }
}

module attributes {stable_mosaic.version = 11 : i64} {
  func.func @_ln_kernel(%arg0: i32, %arg1: memref<16x32xf32, #tpu.memory_space<vmem>>, %arg2: memref<1x32xf32, #tpu.memory_space<vmem>>, %arg3: memref<1x32xf32, #tpu.memory_space<vmem>>, %arg4: memref<16x32xbf16, #tpu.memory_space<vmem>>) attributes {dimension_semantics = [#tpu.dimension_semantics<parallel>], iteration_bounds = array<i64: 1>, scalar_prefetch = 0 : i64, scratch_operands = 0 : i64, tpu.core_type = #tpu.core_type<tc>, window_params = [{transform_indices = @transform_0, window_bounds = array<i64: 16, 32>}, {pipeline_mode = #tpu.pipeline_mode<synchronous>, transform_indices = @transform_1, window_bounds = array<i64: 1, 32>}, {pipeline_mode = #tpu.pipeline_mode<synchronous>, transform_indices = @transform_2, window_bounds = array<i64: 1, 32>}, {transform_indices = @transform_3, window_bounds = array<i64: 16, 32>}]} {
    %c0 = arith.constant 0 : index
    %c0_0 = arith.constant 0 : index
    %0 = vector.load %arg1[%c0, %c0_0] : memref<16x32xf32, #tpu.memory_space<vmem>>, vector<16x32xf32>
    %cst = arith.constant dense<0.000000e+00> : vector<16xf32>
    %1 = vector.multi_reduction <add>, %0, %cst [1] : vector<16x32xf32> to vector<16xf32>
    %2 = vector.shape_cast %1 : vector<16xf32> to vector<16x1xf32>
    %cst_1 = arith.constant 3.200000e+01 : f32
    %3 = vector.broadcast %cst_1 : f32 to vector<16x1xf32>
    %4 = arith.divf %2, %3 : vector<16x1xf32>
    %5 = vector.broadcast %4 : vector<16x1xf32> to vector<16x32xf32>
    %6 = arith.subf %0, %5 : vector<16x32xf32>
    %7 = arith.mulf %6, %6 : vector<16x32xf32>
    %cst_2 = arith.constant dense<0.000000e+00> : vector<16xf32>
    %8 = vector.multi_reduction <add>, %7, %cst_2 [1] : vector<16x32xf32> to vector<16xf32>
    %9 = vector.shape_cast %8 : vector<16xf32> to vector<16x1xf32>
    %cst_3 = arith.constant 3.200000e+01 : f32
    %10 = vector.broadcast %cst_3 : f32 to vector<16x1xf32>
    %11 = arith.divf %9, %10 : vector<16x1xf32>
    %cst_4 = arith.constant 9.99999996E-13 : f32
    %12 = vector.broadcast %cst_4 : f32 to vector<16x1xf32>
    %13 = arith.addf %11, %12 : vector<16x1xf32>
    %14 = math.rsqrt %13 : vector<16x1xf32>
    %15 = vector.broadcast %4 : vector<16x1xf32> to vector<16x32xf32>
    %16 = arith.subf %0, %15 : vector<16x32xf32>
    %17 = vector.broadcast %14 : vector<16x1xf32> to vector<16x32xf32>
    %18 = arith.mulf %16, %17 : vector<16x32xf32>
    %c0_5 = arith.constant 0 : index
    %c0_6 = arith.constant 0 : index
    %19 = vector.load %arg2[%c0_5, %c0_6] : memref<1x32xf32, #tpu.memory_space<vmem>>, vector<1x32xf32>
    %20 = vector.broadcast %19 : vector<1x32xf32> to vector<16x32xf32>
    %21 = arith.mulf %18, %20 : vector<16x32xf32>
    %c0_7 = arith.constant 0 : index
    %c0_8 = arith.constant 0 : index
    %22 = vector.load %arg3[%c0_7, %c0_8] : memref<1x32xf32, #tpu.memory_space<vmem>>, vector<1x32xf32>
    %23 = vector.broadcast %22 : vector<1x32xf32> to vector<16x32xf32>
    %24 = arith.addf %21, %23 : vector<16x32xf32>
    %25 = arith.truncf %24 : vector<16x32xf32> to vector<16x32xbf16>
    %c0_9 = arith.constant 0 : index
    %c0_10 = arith.constant 0 : index
    %26 = vector.load %arg4[%c0_9, %c0_10] : memref<16x32xbf16, #tpu.memory_space<vmem>>, vector<16x32xbf16>
    tpu.vector_store %arg4[%c0_9, %c0_10], %25 {strides = array<i32>} : memref<16x32xbf16, #tpu.memory_space<vmem>>, vector<16x32xbf16>,
    return
  }
  func.func @transform_0(%arg0: i32) -> (i32, i32) {
    %c0_i32 = arith.constant 0 : i32
    %c0_i32_0 = arith.constant 0 : i32
    return %arg0, %c0_i32 : i32, i32
  }
  func.func @transform_1(%arg0: i32) -> (i32, i32) {
    %c0_i32 = arith.constant 0 : i32
    %c0_i32_0 = arith.constant 0 : i32
    %c0_i32_1 = arith.constant 0 : i32
    return %c0_i32, %c0_i32_0 : i32, i32
  }
  func.func @transform_2(%arg0: i32) -> (i32, i32) {
    %c0_i32 = arith.constant 0 : i32
    %c0_i32_0 = arith.constant 0 : i32
    %c0_i32_1 = arith.constant 0 : i32
    return %c0_i32, %c0_i32_0 : i32, i32
  }
  func.func @transform_3(%arg0: i32) -> (i32, i32) {
    %c0_i32 = arith.constant 0 : i32
    %c0_i32_0 = arith.constant 0 : i32
    return %arg0, %c0_i32 : i32, i32
  }
}

module attributes {stable_mosaic.version = 11 : i64} {
  func.func @_linear_ln_kernel(%arg0: i32, %arg1: i32, %arg2: i32, %arg3: memref<16x32xbf16, #tpu.memory_space<vmem>>, %arg4: memref<32x32xbf16, #tpu.memory_space<vmem>>, %arg5: memref<1x32xf32, #tpu.memory_space<vmem>>, %arg6: memref<16x32xbf16, #tpu.memory_space<vmem>>, %arg7: memref<1x32xf32, #tpu.memory_space<vmem>>, %arg8: memref<1x32xf32, #tpu.memory_space<vmem>>, %arg9: memref<16x32xbf16, #tpu.memory_space<vmem>>, %arg10: memref<16x32xf32, #tpu.memory_space<vmem>>) attributes {dimension_semantics = [#tpu.dimension_semantics<parallel>, #tpu.dimension_semantics<parallel>, #tpu.dimension_semantics<arbitrary>], iteration_bounds = array<i64: 1, 1, 1>, scalar_prefetch = 0 : i64, scratch_operands = 1 : i64, tpu.core_type = #tpu.core_type<tc>, window_params = [{transform_indices = @transform_0, window_bounds = array<i64: 16, 32>}, {transform_indices = @transform_1, window_bounds = array<i64: 32, 32>}, {transform_indices = @transform_2, window_bounds = array<i64: 1, 32>}, {transform_indices = @transform_3, window_bounds = array<i64: 16, 32>}, {transform_indices = @transform_4, window_bounds = array<i64: 1, 32>}, {transform_indices = @transform_5, window_bounds = array<i64: 1, 32>}, {transform_indices = @transform_6, window_bounds = array<i64: 16, 32>}]} {
    %c0_i32 = arith.constant 0 : i32
    %0 = arith.cmpi eq, %arg2, %c0_i32 : i32
    %1 = arith.extui %0 : i1 to i32
    %c0_i32_0 = arith.constant 0 : i32
    %2 = arith.cmpi ne, %1, %c0_i32_0 : i32
    scf.if %2 {
      %cst_10 = arith.constant 0.000000e+00 : f32
      %12 = vector.broadcast %cst_10 : f32 to vector<16x32xf32>
      %c0_11 = arith.constant 0 : index
      %c0_12 = arith.constant 0 : index
      %13 = vector.load %arg10[%c0_11, %c0_12] : memref<16x32xf32, #tpu.memory_space<vmem>>, vector<16x32xf32>
      tpu.vector_store %arg10[%c0_11, %c0_12], %12 {strides = array<i32>} : memref<16x32xf32, #tpu.memory_space<vmem>>, vector<16x32xf32>,
    } else {
    }
    %c0 = arith.constant 0 : index
    %c0_1 = arith.constant 0 : index
    %3 = vector.load %arg10[%c0, %c0_1] : memref<16x32xf32, #tpu.memory_space<vmem>>, vector<16x32xf32>
    %c0_2 = arith.constant 0 : index
    %c0_3 = arith.constant 0 : index
    %4 = vector.load %arg3[%c0_2, %c0_3] : memref<16x32xbf16, #tpu.memory_space<vmem>>, vector<16x32xbf16>
    %c0_4 = arith.constant 0 : index
    %c0_5 = arith.constant 0 : index
    %5 = vector.load %arg4[%c0_4, %c0_5] : memref<32x32xbf16, #tpu.memory_space<vmem>>, vector<32x32xbf16>
    %cst = arith.constant dense<0.000000e+00> : vector<16x32xf32>
    %6 = tpu.matmul %4, %5, %cst {dimension_numbers = #tpu.dot_dimension_numbers<[1], [0], [0], [1], [0, 0, 1, 1], [], []>} : vector<16x32xbf16>, vector<32x32xbf16>, vector<16x32xf32> -> vector<16x32xf32>
    %7 = arith.addf %3, %6 : vector<16x32xf32>
    %c0_6 = arith.constant 0 : index
    %c0_7 = arith.constant 0 : index
    %8 = vector.load %arg10[%c0_6, %c0_7] : memref<16x32xf32, #tpu.memory_space<vmem>>, vector<16x32xf32>
    tpu.vector_store %arg10[%c0_6, %c0_7], %7 {strides = array<i32>} : memref<16x32xf32, #tpu.memory_space<vmem>>, vector<16x32xf32>,
    %c0_i32_8 = arith.constant 0 : i32
    %9 = arith.cmpi eq, %arg2, %c0_i32_8 : i32
    %10 = arith.extui %9 : i1 to i32
    %c0_i32_9 = arith.constant 0 : i32
    %11 = arith.cmpi ne, %10, %c0_i32_9 : i32
    scf.if %11 {
      %c0_10 = arith.constant 0 : index
      %c0_11 = arith.constant 0 : index
      %12 = vector.load %arg10[%c0_10, %c0_11] : memref<16x32xf32, #tpu.memory_space<vmem>>, vector<16x32xf32>
      %c0_12 = arith.constant 0 : index
      %c0_13 = arith.constant 0 : index
      %13 = vector.load %arg5[%c0_12, %c0_13] : memref<1x32xf32, #tpu.memory_space<vmem>>, vector<1x32xf32>
      %14 = vector.broadcast %13 : vector<1x32xf32> to vector<16x32xf32>
      %15 = arith.addf %12, %14 : vector<16x32xf32>
      %c0_14 = arith.constant 0 : index
      %c0_15 = arith.constant 0 : index
      %16 = vector.load %arg6[%c0_14, %c0_15] : memref<16x32xbf16, #tpu.memory_space<vmem>>, vector<16x32xbf16>
      %17 = arith.extf %16 : vector<16x32xbf16> to vector<16x32xf32>
      %18 = arith.addf %15, %17 : vector<16x32xf32>
      %cst_16 = arith.constant dense<0.000000e+00> : vector<16xf32>
      %19 = vector.multi_reduction <add>, %18, %cst_16 [1] : vector<16x32xf32> to vector<16xf32>
      %20 = vector.shape_cast %19 : vector<16xf32> to vector<16x1xf32>
      %cst_17 = arith.constant 3.200000e+01 : f32
      %21 = vector.broadcast %cst_17 : f32 to vector<16x1xf32>
      %22 = arith.divf %20, %21 : vector<16x1xf32>
      %23 = vector.broadcast %22 : vector<16x1xf32> to vector<16x32xf32>
      %24 = arith.subf %18, %23 : vector<16x32xf32>
      %25 = arith.mulf %24, %24 : vector<16x32xf32>
      %cst_18 = arith.constant dense<0.000000e+00> : vector<16xf32>
      %26 = vector.multi_reduction <add>, %25, %cst_18 [1] : vector<16x32xf32> to vector<16xf32>
      %27 = vector.shape_cast %26 : vector<16xf32> to vector<16x1xf32>
      %cst_19 = arith.constant 3.200000e+01 : f32
      %28 = vector.broadcast %cst_19 : f32 to vector<16x1xf32>
      %29 = arith.divf %27, %28 : vector<16x1xf32>
      %cst_20 = arith.constant 9.99999996E-13 : f32
      %30 = vector.broadcast %cst_20 : f32 to vector<16x1xf32>
      %31 = arith.addf %29, %30 : vector<16x1xf32>
      %32 = math.rsqrt %31 : vector<16x1xf32>
      %33 = vector.broadcast %22 : vector<16x1xf32> to vector<16x32xf32>
      %34 = arith.subf %18, %33 : vector<16x32xf32>
      %35 = vector.broadcast %32 : vector<16x1xf32> to vector<16x32xf32>
      %36 = arith.mulf %34, %35 : vector<16x32xf32>
      %c0_21 = arith.constant 0 : index
      %c0_22 = arith.constant 0 : index
      %37 = vector.load %arg7[%c0_21, %c0_22] : memref<1x32xf32, #tpu.memory_space<vmem>>, vector<1x32xf32>
      %38 = vector.broadcast %37 : vector<1x32xf32> to vector<16x32xf32>
      %39 = arith.mulf %36, %38 : vector<16x32xf32>
      %c0_23 = arith.constant 0 : index
      %c0_24 = arith.constant 0 : index
      %40 = vector.load %arg8[%c0_23, %c0_24] : memref<1x32xf32, #tpu.memory_space<vmem>>, vector<1x32xf32>
      %41 = vector.broadcast %40 : vector<1x32xf32> to vector<16x32xf32>
      %42 = arith.addf %39, %41 : vector<16x32xf32>
      %43 = arith.truncf %42 : vector<16x32xf32> to vector<16x32xbf16>
      %c0_25 = arith.constant 0 : index
      %c0_26 = arith.constant 0 : index
      %44 = vector.load %arg9[%c0_25, %c0_26] : memref<16x32xbf16, #tpu.memory_space<vmem>>, vector<16x32xbf16>
      tpu.vector_store %arg9[%c0_25, %c0_26], %43 {strides = array<i32>} : memref<16x32xbf16, #tpu.memory_space<vmem>>, vector<16x32xbf16>,
    } else {
    }
    return
  }
  func.func @transform_0(%arg0: i32, %arg1: i32, %arg2: i32) -> (i32, i32) {
    %c0_i32 = arith.constant 0 : i32
    return %arg0, %arg2 : i32, i32
  }
  func.func @transform_1(%arg0: i32, %arg1: i32, %arg2: i32) -> (i32, i32) {
    %c0_i32 = arith.constant 0 : i32
    return %arg2, %arg1 : i32, i32
  }
  func.func @transform_2(%arg0: i32, %arg1: i32, %arg2: i32) -> (i32, i32) {
    %c0_i32 = arith.constant 0 : i32
    %c0_i32_0 = arith.constant 0 : i32
    return %c0_i32, %arg1 : i32, i32
  }
  func.func @transform_3(%arg0: i32, %arg1: i32, %arg2: i32) -> (i32, i32) {
    %c0_i32 = arith.constant 0 : i32
    return %arg0, %arg1 : i32, i32
  }
  func.func @transform_4(%arg0: i32, %arg1: i32, %arg2: i32) -> (i32, i32) {
    %c0_i32 = arith.constant 0 : i32
    %c0_i32_0 = arith.constant 0 : i32
    return %c0_i32, %arg1 : i32, i32
  }
  func.func @transform_5(%arg0: i32, %arg1: i32, %arg2: i32) -> (i32, i32) {
    %c0_i32 = arith.constant 0 : i32
    %c0_i32_0 = arith.constant 0 : i32
    return %c0_i32, %arg1 : i32, i32
  }
  func.func @transform_6(%arg0: i32, %arg1: i32, %arg2: i32) -> (i32, i32) {
    %c0_i32 = arith.constant 0 : i32
    return %arg0, %arg1 : i32, i32
  }
}

module attributes {stable_mosaic.version = 11 : i64} {
  func.func @_attention_kernel(%arg0: i32, %arg1: i32, %arg2: memref<1x8x32xbf16, #tpu.memory_space<vmem>>, %arg3: memref<1x8x32xbf16, #tpu.memory_space<vmem>>, %arg4: memref<1x8x32xbf16, #tpu.memory_space<vmem>>, %arg5: memref<1x1x8xf32, #tpu.memory_space<vmem>>, %arg6: memref<1x8x32xbf16, #tpu.memory_space<vmem>>) attributes {dimension_semantics = [#tpu.dimension_semantics<parallel>, #tpu.dimension_semantics<parallel>], iteration_bounds = array<i64: 2, 1>, scalar_prefetch = 0 : i64, scratch_operands = 0 : i64, tpu.core_type = #tpu.core_type<tc>, window_params = [{transform_indices = @transform_0, window_bounds = array<i64: 1, 8, 32>}, {transform_indices = @transform_1, window_bounds = array<i64: 1, 8, 32>}, {transform_indices = @transform_2, window_bounds = array<i64: 1, 8, 32>}, {transform_indices = @transform_3, window_bounds = array<i64: 1, 1, 8>}, {transform_indices = @transform_4, window_bounds = array<i64: 1, 8, 32>}]} {
    %c0 = arith.constant 0 : index
    %c0_0 = arith.constant 0 : index
    %c0_1 = arith.constant 0 : index
    %0 = vector.load %arg5[%c0, %c0_0, %c0_1] : memref<1x1x8xf32, #tpu.memory_space<vmem>>, vector<1x1x8xf32>
    %1 = vector.shape_cast %0 : vector<1x1x8xf32> to vector<1x8xf32>
    %c0_2 = arith.constant 0 : index
    %c0_3 = arith.constant 0 : index
    %c0_4 = arith.constant 0 : index
    %2 = vector.load %arg2[%c0_2, %c0_3, %c0_4] : memref<1x8x32xbf16, #tpu.memory_space<vmem>>, vector<1x8x8xbf16>
    %3 = vector.shape_cast %2 : vector<1x8x8xbf16> to vector<8x8xbf16>
    %cst = arith.constant 3.535160e-01 : bf16
    %4 = vector.broadcast %cst : bf16 to vector<8x8xbf16>
    %5 = arith.mulf %3, %4 : vector<8x8xbf16>
    %c0_5 = arith.constant 0 : index
    %c0_6 = arith.constant 0 : index
    %c0_7 = arith.constant 0 : index
    %6 = vector.load %arg3[%c0_5, %c0_6, %c0_7] : memref<1x8x32xbf16, #tpu.memory_space<vmem>>, vector<1x8x8xbf16>
    %7 = vector.shape_cast %6 : vector<1x8x8xbf16> to vector<8x8xbf16>
    %c0_8 = arith.constant 0 : index
    %c0_9 = arith.constant 0 : index
    %c0_10 = arith.constant 0 : index
    %8 = vector.load %arg4[%c0_8, %c0_9, %c0_10] : memref<1x8x32xbf16, #tpu.memory_space<vmem>>, vector<1x8x8xbf16>
    %9 = vector.shape_cast %8 : vector<1x8x8xbf16> to vector<8x8xbf16>
    %cst_11 = arith.constant dense<0.000000e+00> : vector<8x8xf32>
    %10 = tpu.matmul %5, %7, %cst_11 {dimension_numbers = #tpu.dot_dimension_numbers<[1], [1], [0], [0], [0, 0, 1, 0], [], []>} : vector<8x8xbf16>, vector<8x8xbf16>, vector<8x8xf32> -> vector<8x8xf32>
    %11 = vector.broadcast %1 : vector<1x8xf32> to vector<8x8xf32>
    %12 = arith.addf %10, %11 : vector<8x8xf32>
    %cst_12 = arith.constant dense<0xFF800000> : vector<8xf32>
    %13 = vector.multi_reduction <maximumf>, %12, %cst_12 [1] : vector<8x8xf32> to vector<8xf32>
    %14 = vector.shape_cast %13 : vector<8xf32> to vector<8x1xf32>
    %15 = vector.broadcast %14 : vector<8x1xf32> to vector<8x8xf32>
    %16 = arith.subf %12, %15 : vector<8x8xf32>
    %17 = math.exp %16 : vector<8x8xf32>
    %cst_13 = arith.constant dense<0.000000e+00> : vector<8xf32>
    %18 = vector.multi_reduction <add>, %17, %cst_13 [1] : vector<8x8xf32> to vector<8xf32>
    %19 = vector.shape_cast %18 : vector<8xf32> to vector<8x1xf32>
    %20 = tpu.reciprocal %19 {approx = true} : vector<8x1xf32> -> vector<8x1xf32>
    %21 = vector.broadcast %20 : vector<8x1xf32> to vector<8x8xf32>
    %22 = arith.mulf %17, %21 : vector<8x8xf32>
    %23 = arith.truncf %22 : vector<8x8xf32> to vector<8x8xbf16>
    %cst_14 = arith.constant dense<0.000000e+00> : vector<8x8xf32>
    %24 = tpu.matmul %23, %9, %cst_14 {dimension_numbers = #tpu.dot_dimension_numbers<[1], [0], [0], [1], [0, 0, 1, 1], [], []>} : vector<8x8xbf16>, vector<8x8xbf16>, vector<8x8xf32> -> vector<8x8xf32>
    %c0_15 = arith.constant 0 : index
    %c0_16 = arith.constant 0 : index
    %c8 = arith.constant 8 : index
    %25 = vector.load %arg2[%c0_15, %c0_16, %c8] : memref<1x8x32xbf16, #tpu.memory_space<vmem>>, vector<1x8x8xbf16>
    %26 = vector.shape_cast %25 : vector<1x8x8xbf16> to vector<8x8xbf16>
    %cst_17 = arith.constant 3.535160e-01 : bf16
    %27 = vector.broadcast %cst_17 : bf16 to vector<8x8xbf16>
    %28 = arith.mulf %26, %27 : vector<8x8xbf16>
    %c0_18 = arith.constant 0 : index
    %c0_19 = arith.constant 0 : index
    %c8_20 = arith.constant 8 : index
    %29 = vector.load %arg3[%c0_18, %c0_19, %c8_20] : memref<1x8x32xbf16, #tpu.memory_space<vmem>>, vector<1x8x8xbf16>
    %30 = vector.shape_cast %29 : vector<1x8x8xbf16> to vector<8x8xbf16>
    %c0_21 = arith.constant 0 : index
    %c0_22 = arith.constant 0 : index
    %c8_23 = arith.constant 8 : index
    %31 = vector.load %arg4[%c0_21, %c0_22, %c8_23] : memref<1x8x32xbf16, #tpu.memory_space<vmem>>, vector<1x8x8xbf16>
    %32 = vector.shape_cast %31 : vector<1x8x8xbf16> to vector<8x8xbf16>
    %cst_24 = arith.constant dense<0.000000e+00> : vector<8x8xf32>
    %33 = tpu.matmul %28, %30, %cst_24 {dimension_numbers = #tpu.dot_dimension_numbers<[1], [1], [0], [0], [0, 0, 1, 0], [], []>} : vector<8x8xbf16>, vector<8x8xbf16>, vector<8x8xf32> -> vector<8x8xf32>
    %34 = vector.broadcast %1 : vector<1x8xf32> to vector<8x8xf32>
    %35 = arith.addf %33, %34 : vector<8x8xf32>
    %cst_25 = arith.constant dense<0xFF800000> : vector<8xf32>
    %36 = vector.multi_reduction <maximumf>, %35, %cst_25 [1] : vector<8x8xf32> to vector<8xf32>
    %37 = vector.shape_cast %36 : vector<8xf32> to vector<8x1xf32>
    %38 = vector.broadcast %37 : vector<8x1xf32> to vector<8x8xf32>
    %39 = arith.subf %35, %38 : vector<8x8xf32>
    %40 = math.exp %39 : vector<8x8xf32>
    %cst_26 = arith.constant dense<0.000000e+00> : vector<8xf32>
    %41 = vector.multi_reduction <add>, %40, %cst_26 [1] : vector<8x8xf32> to vector<8xf32>
    %42 = vector.shape_cast %41 : vector<8xf32> to vector<8x1xf32>
    %43 = tpu.reciprocal %42 {approx = true} : vector<8x1xf32> -> vector<8x1xf32>
    %44 = vector.broadcast %43 : vector<8x1xf32> to vector<8x8xf32>
    %45 = arith.mulf %40, %44 : vector<8x8xf32>
    %46 = arith.truncf %45 : vector<8x8xf32> to vector<8x8xbf16>
    %cst_27 = arith.constant dense<0.000000e+00> : vector<8x8xf32>
    %47 = tpu.matmul %46, %32, %cst_27 {dimension_numbers = #tpu.dot_dimension_numbers<[1], [0], [0], [1], [0, 0, 1, 1], [], []>} : vector<8x8xbf16>, vector<8x8xbf16>, vector<8x8xf32> -> vector<8x8xf32>
    %c0_28 = arith.constant 0 : index
    %c0_29 = arith.constant 0 : index
    %c16 = arith.constant 16 : index
    %48 = vector.load %arg2[%c0_28, %c0_29, %c16] : memref<1x8x32xbf16, #tpu.memory_space<vmem>>, vector<1x8x8xbf16>
    %49 = vector.shape_cast %48 : vector<1x8x8xbf16> to vector<8x8xbf16>
    %cst_30 = arith.constant 3.535160e-01 : bf16
    %50 = vector.broadcast %cst_30 : bf16 to vector<8x8xbf16>
    %51 = arith.mulf %49, %50 : vector<8x8xbf16>
    %c0_31 = arith.constant 0 : index
    %c0_32 = arith.constant 0 : index
    %c16_33 = arith.constant 16 : index
    %52 = vector.load %arg3[%c0_31, %c0_32, %c16_33] : memref<1x8x32xbf16, #tpu.memory_space<vmem>>, vector<1x8x8xbf16>
    %53 = vector.shape_cast %52 : vector<1x8x8xbf16> to vector<8x8xbf16>
    %c0_34 = arith.constant 0 : index
    %c0_35 = arith.constant 0 : index
    %c16_36 = arith.constant 16 : index
    %54 = vector.load %arg4[%c0_34, %c0_35, %c16_36] : memref<1x8x32xbf16, #tpu.memory_space<vmem>>, vector<1x8x8xbf16>
    %55 = vector.shape_cast %54 : vector<1x8x8xbf16> to vector<8x8xbf16>
    %cst_37 = arith.constant dense<0.000000e+00> : vector<8x8xf32>
    %56 = tpu.matmul %51, %53, %cst_37 {dimension_numbers = #tpu.dot_dimension_numbers<[1], [1], [0], [0], [0, 0, 1, 0], [], []>} : vector<8x8xbf16>, vector<8x8xbf16>, vector<8x8xf32> -> vector<8x8xf32>
    %57 = vector.broadcast %1 : vector<1x8xf32> to vector<8x8xf32>
    %58 = arith.addf %56, %57 : vector<8x8xf32>
    %cst_38 = arith.constant dense<0xFF800000> : vector<8xf32>
    %59 = vector.multi_reduction <maximumf>, %58, %cst_38 [1] : vector<8x8xf32> to vector<8xf32>
    %60 = vector.shape_cast %59 : vector<8xf32> to vector<8x1xf32>
    %61 = vector.broadcast %60 : vector<8x1xf32> to vector<8x8xf32>
    %62 = arith.subf %58, %61 : vector<8x8xf32>
    %63 = math.exp %62 : vector<8x8xf32>
    %cst_39 = arith.constant dense<0.000000e+00> : vector<8xf32>
    %64 = vector.multi_reduction <add>, %63, %cst_39 [1] : vector<8x8xf32> to vector<8xf32>
    %65 = vector.shape_cast %64 : vector<8xf32> to vector<8x1xf32>
    %66 = tpu.reciprocal %65 {approx = true} : vector<8x1xf32> -> vector<8x1xf32>
    %67 = vector.broadcast %66 : vector<8x1xf32> to vector<8x8xf32>
    %68 = arith.mulf %63, %67 : vector<8x8xf32>
    %69 = arith.truncf %68 : vector<8x8xf32> to vector<8x8xbf16>
    %cst_40 = arith.constant dense<0.000000e+00> : vector<8x8xf32>
    %70 = tpu.matmul %69, %55, %cst_40 {dimension_numbers = #tpu.dot_dimension_numbers<[1], [0], [0], [1], [0, 0, 1, 1], [], []>} : vector<8x8xbf16>, vector<8x8xbf16>, vector<8x8xf32> -> vector<8x8xf32>
    %c0_41 = arith.constant 0 : index
    %c0_42 = arith.constant 0 : index
    %c24 = arith.constant 24 : index
    %71 = vector.load %arg2[%c0_41, %c0_42, %c24] : memref<1x8x32xbf16, #tpu.memory_space<vmem>>, vector<1x8x8xbf16>
    %72 = vector.shape_cast %71 : vector<1x8x8xbf16> to vector<8x8xbf16>
    %cst_43 = arith.constant 3.535160e-01 : bf16
    %73 = vector.broadcast %cst_43 : bf16 to vector<8x8xbf16>
    %74 = arith.mulf %72, %73 : vector<8x8xbf16>
    %c0_44 = arith.constant 0 : index
    %c0_45 = arith.constant 0 : index
    %c24_46 = arith.constant 24 : index
    %75 = vector.load %arg3[%c0_44, %c0_45, %c24_46] : memref<1x8x32xbf16, #tpu.memory_space<vmem>>, vector<1x8x8xbf16>
    %76 = vector.shape_cast %75 : vector<1x8x8xbf16> to vector<8x8xbf16>
    %c0_47 = arith.constant 0 : index
    %c0_48 = arith.constant 0 : index
    %c24_49 = arith.constant 24 : index
    %77 = vector.load %arg4[%c0_47, %c0_48, %c24_49] : memref<1x8x32xbf16, #tpu.memory_space<vmem>>, vector<1x8x8xbf16>
    %78 = vector.shape_cast %77 : vector<1x8x8xbf16> to vector<8x8xbf16>
    %cst_50 = arith.constant dense<0.000000e+00> : vector<8x8xf32>
    %79 = tpu.matmul %74, %76, %cst_50 {dimension_numbers = #tpu.dot_dimension_numbers<[1], [1], [0], [0], [0, 0, 1, 0], [], []>} : vector<8x8xbf16>, vector<8x8xbf16>, vector<8x8xf32> -> vector<8x8xf32>
    %80 = vector.broadcast %1 : vector<1x8xf32> to vector<8x8xf32>
    %81 = arith.addf %79, %80 : vector<8x8xf32>
    %cst_51 = arith.constant dense<0xFF800000> : vector<8xf32>
    %82 = vector.multi_reduction <maximumf>, %81, %cst_51 [1] : vector<8x8xf32> to vector<8xf32>
    %83 = vector.shape_cast %82 : vector<8xf32> to vector<8x1xf32>
    %84 = vector.broadcast %83 : vector<8x1xf32> to vector<8x8xf32>
    %85 = arith.subf %81, %84 : vector<8x8xf32>
    %86 = math.exp %85 : vector<8x8xf32>
    %cst_52 = arith.constant dense<0.000000e+00> : vector<8xf32>
    %87 = vector.multi_reduction <add>, %86, %cst_52 [1] : vector<8x8xf32> to vector<8xf32>
    %88 = vector.shape_cast %87 : vector<8xf32> to vector<8x1xf32>
    %89 = tpu.reciprocal %88 {approx = true} : vector<8x1xf32> -> vector<8x1xf32>
    %90 = vector.broadcast %89 : vector<8x1xf32> to vector<8x8xf32>
    %91 = arith.mulf %86, %90 : vector<8x8xf32>
    %92 = arith.truncf %91 : vector<8x8xf32> to vector<8x8xbf16>
    %cst_53 = arith.constant dense<0.000000e+00> : vector<8x8xf32>
    %93 = tpu.matmul %92, %78, %cst_53 {dimension_numbers = #tpu.dot_dimension_numbers<[1], [0], [0], [1], [0, 0, 1, 1], [], []>} : vector<8x8xbf16>, vector<8x8xbf16>, vector<8x8xf32> -> vector<8x8xf32>
    %94 = tpu.concatenate %24, %47, %70, %93 in 1 : vector<8x8xf32>, vector<8x8xf32>, vector<8x8xf32>, vector<8x8xf32> -> vector<8x32xf32>
    %95 = arith.truncf %94 : vector<8x32xf32> to vector<8x32xbf16>
    %c0_54 = arith.constant 0 : index
    %c0_55 = arith.constant 0 : index
    %c0_56 = arith.constant 0 : index
    %96 = vector.load %arg6[%c0_54, %c0_55, %c0_56] : memref<1x8x32xbf16, #tpu.memory_space<vmem>>, vector<1x8x32xbf16>
    %97 = vector.shape_cast %96 : vector<1x8x32xbf16> to vector<8x32xbf16>
    %98 = vector.shape_cast %95 : vector<8x32xbf16> to vector<1x8x32xbf16>
    tpu.vector_store %arg6[%c0_54, %c0_55, %c0_56], %98 {strides = array<i32>} : memref<1x8x32xbf16, #tpu.memory_space<vmem>>, vector<1x8x32xbf16>,
    return
  }
  func.func @transform_0(%arg0: i32, %arg1: i32) -> (i32, i32, i32) {
    %c0_i32 = arith.constant 0 : i32
    %c0_i32_0 = arith.constant 0 : i32
    return %arg0, %c0_i32, %arg1 : i32, i32, i32
  }
  func.func @transform_1(%arg0: i32, %arg1: i32) -> (i32, i32, i32) {
    %c0_i32 = arith.constant 0 : i32
    %c0_i32_0 = arith.constant 0 : i32
    return %arg0, %c0_i32, %arg1 : i32, i32, i32
  }
  func.func @transform_2(%arg0: i32, %arg1: i32) -> (i32, i32, i32) {
    %c0_i32 = arith.constant 0 : i32
    %c0_i32_0 = arith.constant 0 : i32
    return %arg0, %c0_i32, %arg1 : i32, i32, i32
  }
  func.func @transform_3(%arg0: i32, %arg1: i32) -> (i32, i32, i32) {
    %c0_i32 = arith.constant 0 : i32
    %c0_i32_0 = arith.constant 0 : i32
    %c0_i32_1 = arith.constant 0 : i32
    return %arg0, %c0_i32, %c0_i32_0 : i32, i32, i32
  }
  func.func @transform_4(%arg0: i32, %arg1: i32) -> (i32, i32, i32) {
    %c0_i32 = arith.constant 0 : i32
    %c0_i32_0 = arith.constant 0 : i32
    return %arg0, %c0_i32, %arg1 : i32, i32, i32
  }
}

module attributes {stable_mosaic.version = 11 : i64} {
  func.func @_linear_kernel(%arg0: i32, %arg1: i32, %arg2: i32, %arg3: memref<16x32xbf16, #tpu.memory_space<vmem>>, %arg4: memref<32x64xbf16, #tpu.memory_space<vmem>>, %arg5: memref<1x64xf32, #tpu.memory_space<vmem>>, %arg6: memref<16x64xbf16, #tpu.memory_space<vmem>>, %arg7: memref<16x64xf32, #tpu.memory_space<vmem>>) attributes {dimension_semantics = [#tpu.dimension_semantics<parallel>, #tpu.dimension_semantics<parallel>, #tpu.dimension_semantics<arbitrary>], iteration_bounds = array<i64: 1, 1, 1>, scalar_prefetch = 0 : i64, scratch_operands = 1 : i64, tpu.core_type = #tpu.core_type<tc>, window_params = [{transform_indices = @transform_0, window_bounds = array<i64: 16, 32>}, {transform_indices = @transform_1, window_bounds = array<i64: 32, 64>}, {transform_indices = @transform_2, window_bounds = array<i64: 1, 64>}, {transform_indices = @transform_3, window_bounds = array<i64: 16, 64>}]} {
    %c0_i32 = arith.constant 0 : i32
    %0 = arith.cmpi eq, %arg2, %c0_i32 : i32
    %1 = arith.extui %0 : i1 to i32
    %c0_i32_0 = arith.constant 0 : i32
    %2 = arith.cmpi ne, %1, %c0_i32_0 : i32
    scf.if %2 {
      %cst_10 = arith.constant 0.000000e+00 : f32
      %12 = vector.broadcast %cst_10 : f32 to vector<16x64xf32>
      %c0_11 = arith.constant 0 : index
      %c0_12 = arith.constant 0 : index
      %13 = vector.load %arg7[%c0_11, %c0_12] : memref<16x64xf32, #tpu.memory_space<vmem>>, vector<16x64xf32>
      tpu.vector_store %arg7[%c0_11, %c0_12], %12 {strides = array<i32>} : memref<16x64xf32, #tpu.memory_space<vmem>>, vector<16x64xf32>,
    } else {
    }
    %c0 = arith.constant 0 : index
    %c0_1 = arith.constant 0 : index
    %3 = vector.load %arg7[%c0, %c0_1] : memref<16x64xf32, #tpu.memory_space<vmem>>, vector<16x64xf32>
    %c0_2 = arith.constant 0 : index
    %c0_3 = arith.constant 0 : index
    %4 = vector.load %arg3[%c0_2, %c0_3] : memref<16x32xbf16, #tpu.memory_space<vmem>>, vector<16x32xbf16>
    %c0_4 = arith.constant 0 : index
    %c0_5 = arith.constant 0 : index
    %5 = vector.load %arg4[%c0_4, %c0_5] : memref<32x64xbf16, #tpu.memory_space<vmem>>, vector<32x64xbf16>
    %cst = arith.constant dense<0.000000e+00> : vector<16x64xf32>
    %6 = tpu.matmul %4, %5, %cst {dimension_numbers = #tpu.dot_dimension_numbers<[1], [0], [0], [1], [0, 0, 1, 1], [], []>} : vector<16x32xbf16>, vector<32x64xbf16>, vector<16x64xf32> -> vector<16x64xf32>
    %7 = arith.addf %3, %6 : vector<16x64xf32>
    %c0_6 = arith.constant 0 : index
    %c0_7 = arith.constant 0 : index
    %8 = vector.load %arg7[%c0_6, %c0_7] : memref<16x64xf32, #tpu.memory_space<vmem>>, vector<16x64xf32>
    tpu.vector_store %arg7[%c0_6, %c0_7], %7 {strides = array<i32>} : memref<16x64xf32, #tpu.memory_space<vmem>>, vector<16x64xf32>,
    %c0_i32_8 = arith.constant 0 : i32
    %9 = arith.cmpi eq, %arg2, %c0_i32_8 : i32
    %10 = arith.extui %9 : i1 to i32
    %c0_i32_9 = arith.constant 0 : i32
    %11 = arith.cmpi ne, %10, %c0_i32_9 : i32
    scf.if %11 {
      %c0_10 = arith.constant 0 : index
      %c0_11 = arith.constant 0 : index
      %12 = vector.load %arg7[%c0_10, %c0_11] : memref<16x64xf32, #tpu.memory_space<vmem>>, vector<16x64xf32>
      %c0_12 = arith.constant 0 : index
      %c0_13 = arith.constant 0 : index
      %13 = vector.load %arg5[%c0_12, %c0_13] : memref<1x64xf32, #tpu.memory_space<vmem>>, vector<1x64xf32>
      %14 = vector.broadcast %13 : vector<1x64xf32> to vector<16x64xf32>
      %15 = arith.addf %12, %14 : vector<16x64xf32>
      %cst_14 = arith.constant 5.000000e-01 : f32
      %16 = vector.broadcast %cst_14 : f32 to vector<16x64xf32>
      %17 = arith.mulf %16, %15 : vector<16x64xf32>
      %cst_15 = arith.constant 4.471500e-02 : f32
      %18 = vector.broadcast %cst_15 : f32 to vector<16x64xf32>
      %19 = arith.mulf %18, %15 : vector<16x64xf32>
      %20 = arith.mulf %19, %15 : vector<16x64xf32>
      %21 = arith.mulf %20, %15 : vector<16x64xf32>
      %22 = arith.addf %15, %21 : vector<16x64xf32>
      %cst_16 = arith.constant 0.797884583 : f32
      %23 = vector.broadcast %cst_16 : f32 to vector<16x64xf32>
      %24 = arith.mulf %23, %22 : vector<16x64xf32>
      %25 = math.tanh %24 : vector<16x64xf32>
      %cst_17 = arith.constant 1.000000e+00 : f32
      %26 = vector.broadcast %cst_17 : f32 to vector<16x64xf32>
      %27 = arith.addf %26, %25 : vector<16x64xf32>
      %28 = arith.mulf %17, %27 : vector<16x64xf32>
      %29 = arith.truncf %28 : vector<16x64xf32> to vector<16x64xbf16>
      %c0_18 = arith.constant 0 : index
      %c0_19 = arith.constant 0 : index
      %30 = vector.load %arg6[%c0_18, %c0_19] : memref<16x64xbf16, #tpu.memory_space<vmem>>, vector<16x64xbf16>
      tpu.vector_store %arg6[%c0_18, %c0_19], %29 {strides = array<i32>} : memref<16x64xbf16, #tpu.memory_space<vmem>>, vector<16x64xbf16>,
    } else {
    }
    return
  }
  func.func @transform_0(%arg0: i32, %arg1: i32, %arg2: i32) -> (i32, i32) {
    %c0_i32 = arith.constant 0 : i32
    return %arg0, %arg2 : i32, i32
  }
  func.func @transform_1(%arg0: i32, %arg1: i32, %arg2: i32) -> (i32, i32) {
    %c0_i32 = arith.constant 0 : i32
    return %arg2, %arg1 : i32, i32
  }
  func.func @transform_2(%arg0: i32, %arg1: i32, %arg2: i32) -> (i32, i32) {
    %c0_i32 = arith.constant 0 : i32
    %c0_i32_0 = arith.constant 0 : i32
    return %c0_i32, %arg1 : i32, i32
  }
  func.func @transform_3(%arg0: i32, %arg1: i32, %arg2: i32) -> (i32, i32) {
    %c0_i32 = arith.constant 0 : i32
    return %arg0, %arg1 : i32, i32
  }
}

module attributes {stable_mosaic.version = 11 : i64} {
  func.func @_span_concat_kernel(%arg0: i32, %arg1: memref<1x8x32xbf16, #tpu.memory_space<vmem>>, %arg2: memref<1x3x8xbf16, #tpu.memory_space<vmem>>, %arg3: memref<1x3x8xbf16, #tpu.memory_space<vmem>>, %arg4: memref<1x3x64xf32, #tpu.memory_space<vmem>>) attributes {dimension_semantics = [#tpu.dimension_semantics<parallel>], iteration_bounds = array<i64: 2>, scalar_prefetch = 0 : i64, scratch_operands = 0 : i64, tpu.core_type = #tpu.core_type<tc>, window_params = [{transform_indices = @transform_0, window_bounds = array<i64: 1, 8, 32>}, {transform_indices = @transform_1, window_bounds = array<i64: 1, 3, 8>}, {transform_indices = @transform_2, window_bounds = array<i64: 1, 3, 8>}, {transform_indices = @transform_3, window_bounds = array<i64: 1, 3, 64>}]} {
    %c0 = arith.constant 0 : index
    %c0_0 = arith.constant 0 : index
    %c0_1 = arith.constant 0 : index
    %0 = vector.load %arg1[%c0, %c0_0, %c0_1] : memref<1x8x32xbf16, #tpu.memory_space<vmem>>, vector<1x8x32xbf16>
    %1 = vector.shape_cast %0 : vector<1x8x32xbf16> to vector<8x32xbf16>
    %c0_2 = arith.constant 0 : index
    %c0_3 = arith.constant 0 : index
    %c0_4 = arith.constant 0 : index
    %2 = vector.load %arg2[%c0_2, %c0_3, %c0_4] : memref<1x3x8xbf16, #tpu.memory_space<vmem>>, vector<1x3x8xbf16>
    %3 = vector.shape_cast %2 : vector<1x3x8xbf16> to vector<3x8xbf16>
    %cst = arith.constant dense<0.000000e+00> : vector<3x32xf32>
    %4 = tpu.matmul %3, %1, %cst {dimension_numbers = #tpu.dot_dimension_numbers<[1], [0], [0], [1], [0, 0, 1, 1], [], []>} : vector<3x8xbf16>, vector<8x32xbf16>, vector<3x32xf32> -> vector<3x32xf32>
    %c0_5 = arith.constant 0 : index
    %c0_6 = arith.constant 0 : index
    %c0_7 = arith.constant 0 : index
    %5 = vector.load %arg3[%c0_5, %c0_6, %c0_7] : memref<1x3x8xbf16, #tpu.memory_space<vmem>>, vector<1x3x8xbf16>
    %6 = vector.shape_cast %5 : vector<1x3x8xbf16> to vector<3x8xbf16>
    %cst_8 = arith.constant dense<0.000000e+00> : vector<3x32xf32>
    %7 = tpu.matmul %6, %1, %cst_8 {dimension_numbers = #tpu.dot_dimension_numbers<[1], [0], [0], [1], [0, 0, 1, 1], [], []>} : vector<3x8xbf16>, vector<8x32xbf16>, vector<3x32xf32> -> vector<3x32xf32>
    %c0_9 = arith.constant 0 : index
    %c0_10 = arith.constant 0 : index
    %c0_11 = arith.constant 0 : index
    %8 = vector.load %arg4[%c0_9, %c0_10, %c0_11] : memref<1x3x64xf32, #tpu.memory_space<vmem>>, vector<1x3x32xf32>
    %9 = vector.shape_cast %8 : vector<1x3x32xf32> to vector<3x32xf32>
    %10 = vector.shape_cast %4 : vector<3x32xf32> to vector<1x3x32xf32>
    tpu.vector_store %arg4[%c0_9, %c0_10, %c0_11], %10 {strides = array<i32>} : memref<1x3x64xf32, #tpu.memory_space<vmem>>, vector<1x3x32xf32>,
    %c0_12 = arith.constant 0 : index
    %c0_13 = arith.constant 0 : index
    %c32 = arith.constant 32 : index
    %11 = vector.load %arg4[%c0_12, %c0_13, %c32] : memref<1x3x64xf32, #tpu.memory_space<vmem>>, vector<1x3x32xf32>
    %12 = vector.shape_cast %11 : vector<1x3x32xf32> to vector<3x32xf32>
    %13 = vector.shape_cast %7 : vector<3x32xf32> to vector<1x3x32xf32>
    tpu.vector_store %arg4[%c0_12, %c0_13, %c32], %13 {strides = array<i32>} : memref<1x3x64xf32, #tpu.memory_space<vmem>>, vector<1x3x32xf32>,
    return
  }
  func.func @transform_0(%arg0: i32) -> (i32, i32, i32) {
    %c0_i32 = arith.constant 0 : i32
    %c0_i32_0 = arith.constant 0 : i32
    %c0_i32_1 = arith.constant 0 : i32
    return %arg0, %c0_i32, %c0_i32_0 : i32, i32, i32
  }
  func.func @transform_1(%arg0: i32) -> (i32, i32, i32) {
    %c0_i32 = arith.constant 0 : i32
    %c0_i32_0 = arith.constant 0 : i32
    %c0_i32_1 = arith.constant 0 : i32
    return %arg0, %c0_i32, %c0_i32_0 : i32, i32, i32
  }
  func.func @transform_2(%arg0: i32) -> (i32, i32, i32) {
    %c0_i32 = arith.constant 0 : i32
    %c0_i32_0 = arith.constant 0 : i32
    %c0_i32_1 = arith.constant 0 : i32
    return %arg0, %c0_i32, %c0_i32_0 : i32, i32, i32
  }
  func.func @transform_3(%arg0: i32) -> (i32, i32, i32) {
    %c0_i32 = arith.constant 0 : i32
    %c0_i32_0 = arith.constant 0 : i32
    %c0_i32_1 = arith.constant 0 : i32
    return %arg0, %c0_i32, %c0_i32_0 : i32, i32, i32
  }
}

module attributes {stable_mosaic.version = 11 : i64} {
  func.func @_linear_ln_kernel(%arg0: i32, %arg1: i32, %arg2: i32, %arg3: memref<16x64xbf16, #tpu.memory_space<vmem>>, %arg4: memref<64x32xbf16, #tpu.memory_space<vmem>>, %arg5: memref<1x32xf32, #tpu.memory_space<vmem>>, %arg6: memref<16x32xbf16, #tpu.memory_space<vmem>>, %arg7: memref<1x32xf32, #tpu.memory_space<vmem>>, %arg8: memref<1x32xf32, #tpu.memory_space<vmem>>, %arg9: memref<16x32xbf16, #tpu.memory_space<vmem>>, %arg10: memref<16x32xf32, #tpu.memory_space<vmem>>) attributes {dimension_semantics = [#tpu.dimension_semantics<parallel>, #tpu.dimension_semantics<parallel>, #tpu.dimension_semantics<arbitrary>], iteration_bounds = array<i64: 1, 1, 1>, scalar_prefetch = 0 : i64, scratch_operands = 1 : i64, tpu.core_type = #tpu.core_type<tc>, window_params = [{transform_indices = @transform_0, window_bounds = array<i64: 16, 64>}, {transform_indices = @transform_1, window_bounds = array<i64: 64, 32>}, {transform_indices = @transform_2, window_bounds = array<i64: 1, 32>}, {transform_indices = @transform_3, window_bounds = array<i64: 16, 32>}, {transform_indices = @transform_4, window_bounds = array<i64: 1, 32>}, {transform_indices = @transform_5, window_bounds = array<i64: 1, 32>}, {transform_indices = @transform_6, window_bounds = array<i64: 16, 32>}]} {
    %c0_i32 = arith.constant 0 : i32
    %0 = arith.cmpi eq, %arg2, %c0_i32 : i32
    %1 = arith.extui %0 : i1 to i32
    %c0_i32_0 = arith.constant 0 : i32
    %2 = arith.cmpi ne, %1, %c0_i32_0 : i32
    scf.if %2 {
      %cst_10 = arith.constant 0.000000e+00 : f32
      %12 = vector.broadcast %cst_10 : f32 to vector<16x32xf32>
      %c0_11 = arith.constant 0 : index
      %c0_12 = arith.constant 0 : index
      %13 = vector.load %arg10[%c0_11, %c0_12] : memref<16x32xf32, #tpu.memory_space<vmem>>, vector<16x32xf32>
      tpu.vector_store %arg10[%c0_11, %c0_12], %12 {strides = array<i32>} : memref<16x32xf32, #tpu.memory_space<vmem>>, vector<16x32xf32>,
    } else {
    }
    %c0 = arith.constant 0 : index
    %c0_1 = arith.constant 0 : index
    %3 = vector.load %arg10[%c0, %c0_1] : memref<16x32xf32, #tpu.memory_space<vmem>>, vector<16x32xf32>
    %c0_2 = arith.constant 0 : index
    %c0_3 = arith.constant 0 : index
    %4 = vector.load %arg3[%c0_2, %c0_3] : memref<16x64xbf16, #tpu.memory_space<vmem>>, vector<16x64xbf16>
    %c0_4 = arith.constant 0 : index
    %c0_5 = arith.constant 0 : index
    %5 = vector.load %arg4[%c0_4, %c0_5] : memref<64x32xbf16, #tpu.memory_space<vmem>>, vector<64x32xbf16>
    %cst = arith.constant dense<0.000000e+00> : vector<16x32xf32>
    %6 = tpu.matmul %4, %5, %cst {dimension_numbers = #tpu.dot_dimension_numbers<[1], [0], [0], [1], [0, 0, 1, 1], [], []>} : vector<16x64xbf16>, vector<64x32xbf16>, vector<16x32xf32> -> vector<16x32xf32>
    %7 = arith.addf %3, %6 : vector<16x32xf32>
    %c0_6 = arith.constant 0 : index
    %c0_7 = arith.constant 0 : index
    %8 = vector.load %arg10[%c0_6, %c0_7] : memref<16x32xf32, #tpu.memory_space<vmem>>, vector<16x32xf32>
    tpu.vector_store %arg10[%c0_6, %c0_7], %7 {strides = array<i32>} : memref<16x32xf32, #tpu.memory_space<vmem>>, vector<16x32xf32>,
    %c0_i32_8 = arith.constant 0 : i32
    %9 = arith.cmpi eq, %arg2, %c0_i32_8 : i32
    %10 = arith.extui %9 : i1 to i32
    %c0_i32_9 = arith.constant 0 : i32
    %11 = arith.cmpi ne, %10, %c0_i32_9 : i32
    scf.if %11 {
      %c0_10 = arith.constant 0 : index
      %c0_11 = arith.constant 0 : index
      %12 = vector.load %arg10[%c0_10, %c0_11] : memref<16x32xf32, #tpu.memory_space<vmem>>, vector<16x32xf32>
      %c0_12 = arith.constant 0 : index
      %c0_13 = arith.constant 0 : index
      %13 = vector.load %arg5[%c0_12, %c0_13] : memref<1x32xf32, #tpu.memory_space<vmem>>, vector<1x32xf32>
      %14 = vector.broadcast %13 : vector<1x32xf32> to vector<16x32xf32>
      %15 = arith.addf %12, %14 : vector<16x32xf32>
      %c0_14 = arith.constant 0 : index
      %c0_15 = arith.constant 0 : index
      %16 = vector.load %arg6[%c0_14, %c0_15] : memref<16x32xbf16, #tpu.memory_space<vmem>>, vector<16x32xbf16>
      %17 = arith.extf %16 : vector<16x32xbf16> to vector<16x32xf32>
      %18 = arith.addf %15, %17 : vector<16x32xf32>
      %cst_16 = arith.constant dense<0.000000e+00> : vector<16xf32>
      %19 = vector.multi_reduction <add>, %18, %cst_16 [1] : vector<16x32xf32> to vector<16xf32>
      %20 = vector.shape_cast %19 : vector<16xf32> to vector<16x1xf32>
      %cst_17 = arith.constant 3.200000e+01 : f32
      %21 = vector.broadcast %cst_17 : f32 to vector<16x1xf32>
      %22 = arith.divf %20, %21 : vector<16x1xf32>
      %23 = vector.broadcast %22 : vector<16x1xf32> to vector<16x32xf32>
      %24 = arith.subf %18, %23 : vector<16x32xf32>
      %25 = arith.mulf %24, %24 : vector<16x32xf32>
      %cst_18 = arith.constant dense<0.000000e+00> : vector<16xf32>
      %26 = vector.multi_reduction <add>, %25, %cst_18 [1] : vector<16x32xf32> to vector<16xf32>
      %27 = vector.shape_cast %26 : vector<16xf32> to vector<16x1xf32>
      %cst_19 = arith.constant 3.200000e+01 : f32
      %28 = vector.broadcast %cst_19 : f32 to vector<16x1xf32>
      %29 = arith.divf %27, %28 : vector<16x1xf32>
      %cst_20 = arith.constant 9.99999996E-13 : f32
      %30 = vector.broadcast %cst_20 : f32 to vector<16x1xf32>
      %31 = arith.addf %29, %30 : vector<16x1xf32>
      %32 = math.rsqrt %31 : vector<16x1xf32>
      %33 = vector.broadcast %22 : vector<16x1xf32> to vector<16x32xf32>
      %34 = arith.subf %18, %33 : vector<16x32xf32>
      %35 = vector.broadcast %32 : vector<16x1xf32> to vector<16x32xf32>
      %36 = arith.mulf %34, %35 : vector<16x32xf32>
      %c0_21 = arith.constant 0 : index
      %c0_22 = arith.constant 0 : index
      %37 = vector.load %arg7[%c0_21, %c0_22] : memref<1x32xf32, #tpu.memory_space<vmem>>, vector<1x32xf32>
      %38 = vector.broadcast %37 : vector<1x32xf32> to vector<16x32xf32>
      %39 = arith.mulf %36, %38 : vector<16x32xf32>
      %c0_23 = arith.constant 0 : index
      %c0_24 = arith.constant 0 : index
      %40 = vector.load %arg8[%c0_23, %c0_24] : memref<1x32xf32, #tpu.memory_space<vmem>>, vector<1x32xf32>
      %41 = vector.broadcast %40 : vector<1x32xf32> to vector<16x32xf32>
      %42 = arith.addf %39, %41 : vector<16x32xf32>
      %43 = arith.truncf %42 : vector<16x32xf32> to vector<16x32xbf16>
      %c0_25 = arith.constant 0 : index
      %c0_26 = arith.constant 0 : index
      %44 = vector.load %arg9[%c0_25, %c0_26] : memref<16x32xbf16, #tpu.memory_space<vmem>>, vector<16x32xbf16>
      tpu.vector_store %arg9[%c0_25, %c0_26], %43 {strides = array<i32>} : memref<16x32xbf16, #tpu.memory_space<vmem>>, vector<16x32xbf16>,
    } else {
    }
    return
  }
  func.func @transform_0(%arg0: i32, %arg1: i32, %arg2: i32) -> (i32, i32) {
    %c0_i32 = arith.constant 0 : i32
    return %arg0, %arg2 : i32, i32
  }
  func.func @transform_1(%arg0: i32, %arg1: i32, %arg2: i32) -> (i32, i32) {
    %c0_i32 = arith.constant 0 : i32
    return %arg2, %arg1 : i32, i32
  }
  func.func @transform_2(%arg0: i32, %arg1: i32, %arg2: i32) -> (i32, i32) {
    %c0_i32 = arith.constant 0 : i32
    %c0_i32_0 = arith.constant 0 : i32
    return %c0_i32, %arg1 : i32, i32
  }
  func.func @transform_3(%arg0: i32, %arg1: i32, %arg2: i32) -> (i32, i32) {
    %c0_i32 = arith.constant 0 : i32
    return %arg0, %arg1 : i32, i32
  }
  func.func @transform_4(%arg0: i32, %arg1: i32, %arg2: i32) -> (i32, i32) {
    %c0_i32 = arith.constant 0 : i32
    %c0_i32_0 = arith.constant 0 : i32
    return %c0_i32, %arg1 : i32, i32
  }
  func.func @transform_5(%arg0: i32, %arg1: i32, %arg2: i32) -> (i32, i32) {
    %c0_i32 = arith.constant 0 : i32
    %c0_i32_0 = arith.constant 0 : i32
    return %c0_i32, %arg1 : i32, i32
  }
  func.func @transform_6(%arg0: i32, %arg1: i32, %arg2: i32) -> (i32, i32) {
    %c0_i32 = arith.constant 0 : i32
    return %arg0, %arg1 : i32, i32
  }
}

</mosaic_0001>

<llo_original>
// kernel: forward.12
$region0: #{forward.12}
  #allocation0 [shape = 'u32[]', space=smem, size = 0x4, offset = 0x4, fixed_abs, tag = 'smem constant byte address 0x4 - core index']
  #allocation1 [shape = 'u32[144,128]{1,0:T(1,128)}', space=vmem, size = 0x12000, scoped, tag = 'internal scratch']
  %s0 = inlined_call_operand.vmem [shape: f32[16,32], index: 0, kind: input, shape index: {}]
  %s1 = inlined_call_operand.vmem [shape: f32[1,32], index: 1, kind: input, shape index: {}]
  %s2 = inlined_call_operand.vmem [shape: f32[1,32], index: 2, kind: input, shape index: {}]
  %s3 = inlined_call_operand.vmem [shape: bf16[16,32], index: 3, kind: output, shape index: {}]
  %s4 = sld [smem:[#allocation0]]
  $region22: #{forward.12} parent=0
    _
  %s6 = ssub.s32 1, %s4
  %s7 = scalar_select 0, %s6, %s4
  // Predicated region
  $region2: #{forward.12} parent=0 // pred_check
    _
  $region3: #{forward.12} parent=0 // pred_check_branch
    %9 = sbr.rel (0) target = $region5
  $region4: #{forward.12} parent=0 // pred_region
    _
  $region5: #{forward.12} parent=0 // pred_fallthru
    _
  // Predicated region
  $region6: #{forward.12} parent=0 // pred_check
    _
  $region7: #{forward.12} parent=0 // pred_check_branch
    %11 = sbr.rel (0) target = $region9
  $region8: #{forward.12} parent=0 // pred_region
    _
  $region9: #{forward.12} parent=0 // pred_fallthru
    _
  // Predicated region
  $region10: #{forward.12} parent=0 // pred_check
    _
  $region11: #{forward.12} parent=0 // pred_check_branch
    %13 = sbr.rel (0) target = $region13
  $region12: #{forward.12} parent=0 // pred_region
    _
  $region13: #{forward.12} parent=0 // pred_fallthru
    _
  %v14 = vld [vmem:[%s0] sm:$0xff]
  %v15 = vld [vmem:[%s0 + $0x8] sm:$0xff]
  %vm16 = vcmask 261120
  %v17 = vsel %vm16, %v14, 0.0
  %18 = vadd.xlane.f32.xlu0 %v17
  %v19 = vpop.xlane.xlu0 %18
  %v20 = vsel %vm16, %v15, 0.0
  %21 = vadd.xlane.f32.xlu0 %v20
  %v22 = vpop.xlane.xlu0 %21
  %v23 = vrcp.pop 32.0
  %v24 = vmul.f32 %v19, %v23
  %v25 = vmul.f32 %v22, %v23
  %v26 = vsub.f32 %v14, %v24
  %v27 = vsub.f32 %v15, %v25
  %v28 = vmul.f32 %v26, %v26
  %v29 = vmul.f32 %v27, %v27
  %v30 = vsel %vm16, %v28, 0.0
  %31 = vadd.xlane.f32.xlu0 %v30
  %v32 = vpop.xlane.xlu0 %31
  %v33 = vsel %vm16, %v29, 0.0
  %34 = vadd.xlane.f32.xlu0 %v33
  %v35 = vpop.xlane.xlu0 %34
  %v36 = vmul.f32 %v32, %v23
  %v37 = vmul.f32 %v35, %v23
  %v38 = vadd.f32 %v36, 1e-12
  %v39 = vadd.f32 %v37, 1e-12
  %v40 = vrsqrt.pop %v38
  %v41 = vrsqrt.pop %v39
  %v42 = vmul.f32 %v26, %v40
  %v43 = vmul.f32 %v27, %v41
  %v44 = vld [vmem:[%s1] sm:$0x1]
  %v46 = vlaneseq
  %v47 = vshrl.u32 %v46, 7
  %v48 = vsub.s32 0, %v47
  %v49 = vrot.slane %v44, %v48
  %v51 = vmul.f32 %v42, %v49
  %v52 = vmul.f32 %v43, %v49
  %v53 = vld [vmem:[%s2] sm:$0x1]
  %v55 = vlaneseq
  %v56 = vshrl.u32 %v55, 7
  %v57 = vsub.s32 0, %v56
  %v58 = vrot.slane %v53, %v57
  %v60 = vadd.f32 %v51, %v58
  %v61 = vadd.f32 %v52, %v58
  %v62 = vpack.c.bf16 %v61, %v60
  %v64 = vunpack.c.l.b16 %v62
  %v65 = vunpack.c.h.b16 %v62
  %v66 = vpack.c.b16 %v64, %v64
  %v67 = vpack.c.b16 %v65, %v65
  %vm70 = vcmask 257024
  %71 = vst.msk [vmem:[%s3] sm:$0xf] %vm70, %v66
  %72 = vst.msk [vmem:[%s3 + $0x4] sm:$0xf] %vm70, %v67
  // Predicated region
  $region14: #{forward.12} parent=0 // pred_check
    _
  $region15: #{forward.12} parent=0 // pred_check_branch
    %74 = sbr.rel (0) target = $region17
  $region16: #{forward.12} parent=0 // pred_region
    _
  $region17: #{forward.12} parent=0 // pred_fallthru
    _
  // Predicated region
  $region18: #{forward.12} parent=0 // pred_check
    _
  $region19: #{forward.12} parent=0 // pred_check_branch
    %76 = sbr.rel (0) target = $region21
  $region20: #{forward.12} parent=0 // pred_region
    _
  $region21: #{forward.12} parent=0 // pred_fallthru
    _

// kernel: forward.13
$region0: #{forward.13}
  #allocation0 [shape = 'u32[]', space=smem, size = 0x4, offset = 0x4, fixed_abs, tag = 'smem constant byte address 0x4 - core index']
  #allocation1 [shape = 'u32[144,128]{1,0:T(1,128)}', space=vmem, size = 0x12000, scoped, tag = 'internal scratch']
  #allocation2 [shape = 'f32[16,96]{1,0:T(8,128)}', space=vmem, size = 0x2000, scoped, tag = 'scratch operand']
  %s0 = inlined_call_operand.vmem [shape: bf16[16,32], index: 0, kind: input, shape index: {}]
  %s1 = inlined_call_operand.vmem [shape: bf16[32,96], index: 1, kind: input, shape index: {}]
  %s2 = inlined_call_operand.vmem [shape: f32[1,96], index: 2, kind: input, shape index: {}]
  %s3 = inlined_call_operand.vmem [shape: bf16[16,96], index: 3, kind: output, shape index: {}]
  %s4 = sld [smem:[#allocation0]]
  $region30: #{forward.13} parent=0
    _
  %s6 = ssub.s32 1, %s4
  %s7 = scalar_select 0, %s6, %s4
  // Predicated region
  $region2: #{forward.13} parent=0 // pred_check
    _
  $region3: #{forward.13} parent=0 // pred_check_branch
    %9 = sbr.rel (0) target = $region5
  $region4: #{forward.13} parent=0 // pred_region
    _
  $region5: #{forward.13} parent=0 // pred_fallthru
    _
  // Predicated region
  $region6: #{forward.13} parent=0 // pred_check
    _
  $region7: #{forward.13} parent=0 // pred_check_branch
    %11 = sbr.rel (0) target = $region9
  $region8: #{forward.13} parent=0 // pred_region
    _
  $region9: #{forward.13} parent=0 // pred_fallthru
    _
  // Predicated region
  $region10: #{forward.13} parent=0 // pred_check
    _
  $region11: #{forward.13} parent=0 // pred_check_branch
    %13 = sbr.rel (0) target = $region13
  $region12: #{forward.13} parent=0 // pred_region
    _
  $region13: #{forward.13} parent=0 // pred_fallthru
    _
  %p15 = scmp.eq.s32.totalorder 0, 0
  // Predicated region
  $region14: #{forward.13} parent=0 // pred_check
    %p16 = pneg %p15
  $region15: #{forward.13} parent=0 // pred_check_branch
    %18 = sbr.rel (%p16) target = $region17
  $region16: #{forward.13} parent=0 // pred_region
    %vm19 = vcmask 785408
    %20 = vst.msk [vmem:[#allocation2] sm:$0xff] %vm19, 0.0
    %21 = vst.msk [vmem:[#allocation2 + $0x8] sm:$0xff] %vm19, 0.0
  $region17: #{forward.13} parent=0 // pred_fallthru
    _
  %v22 = vld [vmem:[#allocation2] sm:$0xff]
  %v23 = vld [vmem:[#allocation2 + $0x8] sm:$0xff]
  %v24 = vld [vmem:[%s0] sm:$0xf]
  %v25 = vld [vmem:[%s0 + $0x4] sm:$0xf]
  %v26 = vld [vmem:[%s1] sm:$0xf]
  %v27 = vld [vmem:[%s1 + $0x4] sm:$0xf]
  %v28 = vld [vmem:[%s1 + $0x8] sm:$0xf]
  %v29 = vld [vmem:[%s1 + $0xc] sm:$0xf]
  %v32 = vunpack.c.l.b16 %v24
  %v33 = vunpack.c.l.b16 %v25
  %v34 = vpack.c.b16 %v33, %v32
  %v39 = vunpack.c.l.b16 %v26
  %v40 = vunpack.c.l.b16 %v27
  %v41 = vunpack.c.l.b16 %v28
  %v42 = vunpack.c.l.b16 %v29
  %v43 = vpack.c.b16 %v40, %v39
  %v44 = vpack.c.b16 %v42, %v41
  %vm47 = vcmask 261120
  %v49 = vsel %vm47, %v34, 0
  %51 = vmatprep.subr.bf16.mxu0 0
  %52 = vmatpush1.bf16.msra.mxu0 %v43
  %53 = vmatprep.subr.bf16.mxu0 0
  %54 = vmatpush1.bf16.msra.mxu0 %v44
  %55 = vmatprep.subr.bf16.mxu0 0
  %56 = vmatpush1.bf16.msra.mxu0 0
  %57 = vmatprep.subr.bf16.mxu0 0
  %58 = vmatpush1.bf16.msra.mxu0 0
  %59 = vmatprep.subr.bf16.mxu0 0
  %60 = vmatpush1.bf16.msra.mxu0 0
  %61 = vmatprep.subr.bf16.mxu0 0
  %62 = vmatpush1.bf16.msra.mxu0 0
  %63 = vmatprep.subr.bf16.mxu0 0
  %64 = vmatpush1.bf16.msra.mxu0 0
  %65 = vmatprep.subr.bf16.mxu0 0
  %66 = vmatpush1.bf16.msra.mxu0 0
  %67 = vmatprep.subr.bf16.mxu0 0
  %68 = vmatpush1.bf16.msra.mxu0 0
  %69 = vmatprep.subr.bf16.mxu0 0
  %70 = vmatpush1.bf16.msra.mxu0 0
  %71 = vmatprep.subr.bf16.mxu0 0
  %72 = vmatpush1.bf16.msra.mxu0 0
  %73 = vmatprep.subr.bf16.mxu0 0
  %74 = vmatpush1.bf16.msra.mxu0 0
  %75 = vmatprep.subr.bf16.mxu0 0
  %76 = vmatpush1.bf16.msra.mxu0 0
  %77 = vmatprep.subr.bf16.mxu0 0
  %78 = vmatpush1.bf16.msra.mxu0 0
  %79 = vmatprep.subr.bf16.mxu0 0
  %80 = vmatpush1.bf16.msra.mxu0 0
  %81 = vmatprep.subr.bf16.mxu0 0
  %82 = vmatpush1.bf16.msra.mxu0 0
  %83 = vmatprep.mubr.bf16.mxu0 0
  %84 = vmatmul.mubr.bf16.gmra.mrb[0].mxu0 %v49
  %v85 = vpop.f32.mrb[0].mxu0
  %v86 = vadd.f32 0.0, %v85
  %v87 = vpop.f32.mrb[0].mxu0
  %v88 = vpop.f32.mrb[0].mxu0
  %v89 = vadd.f32 0.0, %v88
  %v90 = vpop.f32.mrb[0].mxu0
  %91 = vdwg.mxu0
  %v92 = vadd.f32 %v22, %v86
  %v93 = vadd.f32 %v23, %v89
  %vm94 = vcmask 785408
  %95 = vst.msk [vmem:[#allocation2] sm:$0xff] %vm94, %v92
  %96 = vst.msk [vmem:[#allocation2 + $0x8] sm:$0xff] %vm94, %v93
  // Predicated region
  $region18: #{forward.13} parent=0 // pred_check
    %p97 = pneg %p15
  $region19: #{forward.13} parent=0 // pred_check_branch
    %99 = sbr.rel (%p97) target = $region21
  $region20: #{forward.13} parent=0 // pred_region
    %v100 = vld [vmem:[#allocation2] sm:$0xff]
    %v101 = vld [vmem:[#allocation2 + $0x8] sm:$0xff]
    %v102 = vld [vmem:[%s2] sm:$0x1]
    %v104 = vlaneseq
    %v105 = vshrl.u32 %v104, 7
    %v106 = vsub.s32 0, %v105
    %v107 = vrot.slane %v102, %v106
    %v109 = vadd.f32 %v100, %v107
    %v110 = vadd.f32 %v101, %v107
    %v111 = vpack.c.bf16 %v110, %v109
    %v113 = vunpack.c.l.b16 %v111
    %v114 = vunpack.c.h.b16 %v111
    %v115 = vpack.c.b16 %v113, %v113
    %v116 = vpack.c.b16 %v114, %v114
    %vm119 = vcmask 781312
    %120 = vst.msk [vmem:[%s3] sm:$0xf] %vm119, %v115
    %121 = vst.msk [vmem:[%s3 + $0x4] sm:$0xf] %vm119, %v116
  $region21: #{forward.13} parent=0 // pred_fallthru
    _
  // Predicated region
  $region22: #{forward.13} parent=0 // pred_check
    _
  $region23: #{forward.13} parent=0 // pred_check_branch
    %123 = sbr.rel (0) target = $region25
  $region24: #{forward.13} parent=0 // pred_region
    _
  $region25: #{forward.13} parent=0 // pred_fallthru
    _
  // Predicated region
  $region26: #{forward.13} parent=0 // pred_check
    _
  $region27: #{forward.13} parent=0 // pred_check_branch
    %125 = sbr.rel (0) target = $region29
  $region28: #{forward.13} parent=0 // pred_region
    _
  $region29: #{forward.13} parent=0 // pred_fallthru
    _

// kernel: forward.15
$region0: #{forward.15}
  #allocation0 [shape = 'u32[]', space=smem, size = 0x4, offset = 0x4, fixed_abs, tag = 'smem constant byte address 0x4 - core index']
  #allocation1 [shape = 'u32[144,128]{1,0:T(1,128)}', space=vmem, size = 0x12000, scoped, tag = 'internal scratch']
  #allocation2 [shape = 'f32[16,32]{1,0:T(8,128)}', space=vmem, size = 0x2000, scoped, tag = 'scratch operand']
  %s0 = inlined_call_operand.vmem [shape: bf16[16,32], index: 0, kind: input, shape index: {}]
  %s1 = inlined_call_operand.vmem [shape: bf16[32,32], index: 1, kind: input, shape index: {}]
  %s2 = inlined_call_operand.vmem [shape: f32[1,32], index: 2, kind: input, shape index: {}]
  %s3 = inlined_call_operand.vmem [shape: bf16[16,32], index: 3, kind: input, shape index: {}]
  %s4 = inlined_call_operand.vmem [shape: f32[1,32], index: 4, kind: input, shape index: {}]
  %s5 = inlined_call_operand.vmem [shape: f32[1,32], index: 5, kind: input, shape index: {}]
  %s6 = inlined_call_operand.vmem [shape: bf16[16,32], index: 6, kind: output, shape index: {}]
  %s7 = sld [smem:[#allocation0]]
  $region42: #{forward.15} parent=0
    _
  %s9 = ssub.s32 1, %s7
  %s10 = scalar_select 0, %s9, %s7
  // Predicated region
  $region2: #{forward.15} parent=0 // pred_check
    _
  $region3: #{forward.15} parent=0 // pred_check_branch
    %12 = sbr.rel (0) target = $region5
  $region4: #{forward.15} parent=0 // pred_region
    _
  $region5: #{forward.15} parent=0 // pred_fallthru
    _
  // Predicated region
  $region6: #{forward.15} parent=0 // pred_check
    _
  $region7: #{forward.15} parent=0 // pred_check_branch
    %14 = sbr.rel (0) target = $region9
  $region8: #{forward.15} parent=0 // pred_region
    _
  $region9: #{forward.15} parent=0 // pred_fallthru
    _
  // Predicated region
  $region10: #{forward.15} parent=0 // pred_check
    _
  $region11: #{forward.15} parent=0 // pred_check_branch
    %16 = sbr.rel (0) target = $region13
  $region12: #{forward.15} parent=0 // pred_region
    _
  $region13: #{forward.15} parent=0 // pred_fallthru
    _
  // Predicated region
  $region14: #{forward.15} parent=0 // pred_check
    _
  $region15: #{forward.15} parent=0 // pred_check_branch
    %18 = sbr.rel (0) target = $region17
  $region16: #{forward.15} parent=0 // pred_region
    _
  $region17: #{forward.15} parent=0 // pred_fallthru
    _
  // Predicated region
  $region18: #{forward.15} parent=0 // pred_check
    _
  $region19: #{forward.15} parent=0 // pred_check_branch
    %20 = sbr.rel (0) target = $region21
  $region20: #{forward.15} parent=0 // pred_region
    _
  $region21: #{forward.15} parent=0 // pred_fallthru
    _
  // Predicated region
  $region22: #{forward.15} parent=0 // pred_check
    _
  $region23: #{forward.15} parent=0 // pred_check_branch
    %22 = sbr.rel (0) target = $region25
  $region24: #{forward.15} parent=0 // pred_region
    _
  $region25: #{forward.15} parent=0 // pred_fallthru
    _
  %p24 = scmp.eq.s32.totalorder 0, 0
  // Predicated region
  $region26: #{forward.15} parent=0 // pred_check
    %p25 = pneg %p24
  $region27: #{forward.15} parent=0 // pred_check_branch
    %27 = sbr.rel (%p25) target = $region29
  $region28: #{forward.15} parent=0 // pred_region
    %vm28 = vcmask 261120
    %29 = vst.msk [vmem:[#allocation2] sm:$0xff] %vm28, 0.0
    %30 = vst.msk [vmem:[#allocation2 + $0x8] sm:$0xff] %vm28, 0.0
  $region29: #{forward.15} parent=0 // pred_fallthru
    _
  %v31 = vld [vmem:[#allocation2] sm:$0xff]
  %v32 = vld [vmem:[#allocation2 + $0x8] sm:$0xff]
  %v33 = vld [vmem:[%s0] sm:$0xf]
  %v34 = vld [vmem:[%s0 + $0x4] sm:$0xf]
  %v35 = vld [vmem:[%s1] sm:$0xf]
  %v36 = vld [vmem:[%s1 + $0x4] sm:$0xf]
  %v37 = vld [vmem:[%s1 + $0x8] sm:$0xf]
  %v38 = vld [vmem:[%s1 + $0xc] sm:$0xf]
  %v41 = vunpack.c.l.b16 %v33
  %v42 = vunpack.c.l.b16 %v34
  %v43 = vpack.c.b16 %v42, %v41
  %v48 = vunpack.c.l.b16 %v35
  %v49 = vunpack.c.l.b16 %v36
  %v50 = vunpack.c.l.b16 %v37
  %v51 = vunpack.c.l.b16 %v38
  %v52 = vpack.c.b16 %v49, %v48
  %v53 = vpack.c.b16 %v51, %v50
  %vm56 = vcmask 261120
  %v58 = vsel %vm56, %v43, 0
  %60 = vmatprep.subr.bf16.mxu0 0
  %61 = vmatpush1.bf16.msra.mxu0 %v52
  %62 = vmatprep.subr.bf16.mxu0 0
  %63 = vmatpush1.bf16.msra.mxu0 %v53
  %64 = vmatprep.subr.bf16.mxu0 0
  %65 = vmatpush1.bf16.msra.mxu0 0
  %66 = vmatprep.subr.bf16.mxu0 0
  %67 = vmatpush1.bf16.msra.mxu0 0
  %68 = vmatprep.subr.bf16.mxu0 0
  %69 = vmatpush1.bf16.msra.mxu0 0
  %70 = vmatprep.subr.bf16.mxu0 0
  %71 = vmatpush1.bf16.msra.mxu0 0
  %72 = vmatprep.subr.bf16.mxu0 0
  %73 = vmatpush1.bf16.msra.mxu0 0
  %74 = vmatprep.subr.bf16.mxu0 0
  %75 = vmatpush1.bf16.msra.mxu0 0
  %76 = vmatprep.subr.bf16.mxu0 0
  %77 = vmatpush1.bf16.msra.mxu0 0
  %78 = vmatprep.subr.bf16.mxu0 0
  %79 = vmatpush1.bf16.msra.mxu0 0
  %80 = vmatprep.subr.bf16.mxu0 0
  %81 = vmatpush1.bf16.msra.mxu0 0
  %82 = vmatprep.subr.bf16.mxu0 0
  %83 = vmatpush1.bf16.msra.mxu0 0
  %84 = vmatprep.subr.bf16.mxu0 0
  %85 = vmatpush1.bf16.msra.mxu0 0
  %86 = vmatprep.subr.bf16.mxu0 0
  %87 = vmatpush1.bf16.msra.mxu0 0
  %88 = vmatprep.subr.bf16.mxu0 0
  %89 = vmatpush1.bf16.msra.mxu0 0
  %90 = vmatprep.subr.bf16.mxu0 0
  %91 = vmatpush1.bf16.msra.mxu0 0
  %92 = vmatprep.mubr.bf16.mxu0 0
  %93 = vmatmul.mubr.bf16.gmra.mrb[0].mxu0 %v58
  %v94 = vpop.f32.mrb[0].mxu0
  %v95 = vadd.f32 0.0, %v94
  %v96 = vpop.f32.mrb[0].mxu0
  %v97 = vpop.f32.mrb[0].mxu0
  %v98 = vadd.f32 0.0, %v97
  %v99 = vpop.f32.mrb[0].mxu0
  %100 = vdwg.mxu0
  %v101 = vadd.f32 %v31, %v95
  %v102 = vadd.f32 %v32, %v98
  %103 = vst.msk [vmem:[#allocation2] sm:$0xff] %vm56, %v101
  %104 = vst.msk [vmem:[#allocation2 + $0x8] sm:$0xff] %vm56, %v102
  // Predicated region
  $region30: #{forward.15} parent=0 // pred_check
    %p105 = pneg %p24
  $region31: #{forward.15} parent=0 // pred_check_branch
    %107 = sbr.rel (%p105) target = $region33
  $region32: #{forward.15} parent=0 // pred_region
    %v108 = vld [vmem:[#allocation2] sm:$0xff]
    %v109 = vld [vmem:[#allocation2 + $0x8] sm:$0xff]
    %v110 = vld [vmem:[%s2] sm:$0x1]
    %v112 = vlaneseq
    %v113 = vshrl.u32 %v112, 7
    %v114 = vsub.s32 0, %v113
    %v115 = vrot.slane %v110, %v114
    %v117 = vadd.f32 %v108, %v115
    %v118 = vadd.f32 %v109, %v115
    %v119 = vld [vmem:[%s3] sm:$0xf]
    %v120 = vld [vmem:[%s3 + $0x4] sm:$0xf]
    %v121 = vunpack.c.l.bf16 %v119
    %v122 = vunpack.c.l.bf16 %v120
    %v123 = vadd.f32 %v117, %v121
    %v124 = vadd.f32 %v118, %v122
    %v125 = vsel %vm56, %v123, 0.0
    %126 = vadd.xlane.f32.xlu0 %v125
    %v127 = vpop.xlane.xlu0 %126
    %v128 = vsel %vm56, %v124, 0.0
    %129 = vadd.xlane.f32.xlu0 %v128
    %v130 = vpop.xlane.xlu0 %129
    %v131 = vrcp.pop 32.0
    %v132 = vmul.f32 %v127, %v131
    %v133 = vmul.f32 %v130, %v131
    %v134 = vsub.f32 %v123, %v132
    %v135 = vsub.f32 %v124, %v133
    %v136 = vmul.f32 %v134, %v134
    %v137 = vmul.f32 %v135, %v135
    %v138 = vsel %vm56, %v136, 0.0
    %139 = vadd.xlane.f32.xlu0 %v138
    %v140 = vpop.xlane.xlu0 %139
    %v141 = vsel %vm56, %v137, 0.0
    %142 = vadd.xlane.f32.xlu0 %v141
    %v143 = vpop.xlane.xlu0 %142
    %v144 = vmul.f32 %v140, %v131
    %v145 = vmul.f32 %v143, %v131
    %v146 = vadd.f32 %v144, 1e-12
    %v147 = vadd.f32 %v145, 1e-12
    %v148 = vrsqrt.pop %v146
    %v149 = vrsqrt.pop %v147
    %v150 = vmul.f32 %v134, %v148
    %v151 = vmul.f32 %v135, %v149
    %v152 = vld [vmem:[%s4] sm:$0x1]
    %v154 = vlaneseq
    %v155 = vshrl.u32 %v154, 7
    %v156 = vsub.s32 0, %v155
    %v157 = vrot.slane %v152, %v156
    %v159 = vmul.f32 %v150, %v157
    %v160 = vmul.f32 %v151, %v157
    %v161 = vld [vmem:[%s5] sm:$0x1]
    %v163 = vlaneseq
    %v164 = vshrl.u32 %v163, 7
    %v165 = vsub.s32 0, %v164
    %v166 = vrot.slane %v161, %v165
    %v168 = vadd.f32 %v159, %v166
    %v169 = vadd.f32 %v160, %v166
    %v170 = vpack.c.bf16 %v169, %v168
    %v172 = vunpack.c.l.b16 %v170
    %v173 = vunpack.c.h.b16 %v170
    %v174 = vpack.c.b16 %v172, %v172
    %v175 = vpack.c.b16 %v173, %v173
    %vm178 = vcmask 257024
    %179 = vst.msk [vmem:[%s6] sm:$0xf] %vm178, %v174
    %180 = vst.msk [vmem:[%s6 + $0x4] sm:$0xf] %vm178, %v175
  $region33: #{forward.15} parent=0 // pred_fallthru
    _
  // Predicated region
  $region34: #{forward.15} parent=0 // pred_check
    _
  $region35: #{forward.15} parent=0 // pred_check_branch
    %182 = sbr.rel (0) target = $region37
  $region36: #{forward.15} parent=0 // pred_region
    _
  $region37: #{forward.15} parent=0 // pred_fallthru
    _
  // Predicated region
  $region38: #{forward.15} parent=0 // pred_check
    _
  $region39: #{forward.15} parent=0 // pred_check_branch
    %184 = sbr.rel (0) target = $region41
  $region40: #{forward.15} parent=0 // pred_region
    _
  $region41: #{forward.15} parent=0 // pred_fallthru
    _

// kernel: forward.14
$region0: #{forward.14}
  #allocation0 [shape = 'u32[]', space=smem, size = 0x4, offset = 0x4, fixed_abs, tag = 'smem constant byte address 0x4 - core index']
  #allocation1 [shape = 'u32[144,128]{1,0:T(1,128)}', space=vmem, size = 0x12000, scoped, tag = 'internal scratch']
  %s0 = inlined_call_operand.vmem [shape: bf16[2,8,32], index: 0, kind: input, shape index: {}]
  %s1 = inlined_call_operand.vmem [shape: bf16[2,8,32], index: 1, kind: input, shape index: {}]
  %s2 = inlined_call_operand.vmem [shape: bf16[2,8,32], index: 2, kind: input, shape index: {}]
  %s3 = inlined_call_operand.vmem [shape: f32[2,1,8], index: 3, kind: input, shape index: {}]
  %s4 = inlined_call_operand.vmem [shape: bf16[2,8,32], index: 4, kind: output, shape index: {}]
  %s5 = sld [smem:[#allocation0]]
  $region49: #{forward.14} parent=0
    _
  %s7 = ssub.s32 1, %s5
  %s8 = scalar_select 0, %s7, %s5
  loop: start=0, step=1, limit=4
  $region2: #{forward.14} parent=0 // loop_pre_header
    _
  $region3: #{forward.14} parent=0 // loop_header
    %s10 = sphi 0, %s14
    %p11 = scmp.ge.s32.totalorder %s10, 4
    %s17 = sphi 0, %s29
    %s18 = sphi 0, %s25
    %s19 = sphi 0, %s17
    %s20 = sphi 0, %s18
    %s21 = sphi 0, %s19
    %s22 = sphi 0, %s20
    %s34 = sphi 0, %s36
    %s37 = sphi 0, %s34
    %s38 = sphi 0, %s37
    %s54 = sphi 0, %s38
    %s62 = sphi 0, %s64
    %s65 = sphi 0, %s62
    %s66 = sphi 0, %s65
    %s82 = sphi 0, %s66
    %s90 = sphi 0, %s92
    %s93 = sphi 0, %s90
    %s94 = sphi 0, %s93
    %s110 = sphi 0, %s94
    %s116 = sphi 0, %s118
    %s119 = sphi 0, %s116
    %s120 = sphi 0, %s119
    %s136 = sphi 0, %s120
    %s144 = sphi 0, %s146
    %s147 = sphi 0, %s144
    %s148 = sphi 0, %s147
    %s164 = sphi 0, %s148
  $region4: #{forward.14} parent=0 // loop_header_branch
    %13 = sbr.rel (%p11) target = $region8
  $region5: #{forward.14} parent=0 // loop_body
    %s15 = ssub.s32 %s10, 1
    %s16 = ssub.s32 %s10, 2
    %s23 = sadd.s32 1, %s18
    %p24 = scmp.ge.s32.totalorder %s23, 1
    %s25 = scalar_select %p24, 0, %s23
    %s26 = sadd.s32 1, %s17
    %s27 = scalar_select %p24, %s26, %s17
    %p28 = scmp.ge.s32.totalorder %s27, 2
    %s29 = scalar_select %p28, 0, %s27
    %s30 = ssub.s32 %s17, %s29
    %s31 = ssub.s32 %s18, %s25
    %s32 = sor.u32 %s30, %s31
    %p33 = scmp.eq.s32.totalorder %s32, 0
    %s35 = sadd.s32 %s34, 1
    %s36 = scalar_select %p33, %s34, %s35
    %p39 = pneg %p33
    %p40 = scmp.eq.s32.totalorder %s10, 1
    %p41 = por %p39, %p40
    %p42 = scmp.ne.s32.totalorder %s34, %s37
    %p43 = scmp.eq.s32.totalorder %s10, 0
    %p44 = por %p42, %p43
    %p45 = scmp.ne.s32.totalorder %s34, %s37
    %p46 = scmp.eq.s32.totalorder %s15, 1
    %p47 = por %p45, %p46
    %p48 = scmp.ne.s32.totalorder %s37, %s38
    %p49 = scmp.eq.s32.totalorder %s15, 0
    %p50 = por %p48, %p49
    %p51 = scmp.ne.s32.totalorder %s37, %s38
    %p52 = scmp.eq.s32.totalorder %s16, 1
    %p53 = por %p51, %p52
    %p55 = scmp.ne.s32.totalorder %s38, %s54
    %p56 = scmp.eq.s32.totalorder %s16, 0
    %p57 = por %p55, %p56
    %s58 = ssub.s32 %s17, %s29
    %s59 = ssub.s32 %s18, %s25
    %s60 = sor.u32 %s58, %s59
    %p61 = scmp.eq.s32.totalorder %s60, 0
    %s63 = sadd.s32 %s62, 1
    %s64 = scalar_select %p61, %s62, %s63
    %p67 = pneg %p61
    %p68 = scmp.eq.s32.totalorder %s10, 1
    %p69 = por %p67, %p68
    %p70 = scmp.ne.s32.totalorder %s62, %s65
    %p71 = scmp.eq.s32.totalorder %s10, 0
    %p72 = por %p70, %p71
    %p73 = scmp.ne.s32.totalorder %s62, %s65
    %p74 = scmp.eq.s32.totalorder %s15, 1
    %p75 = por %p73, %p74
    %p76 = scmp.ne.s32.totalorder %s65, %s66
    %p77 = scmp.eq.s32.totalorder %s15, 0
    %p78 = por %p76, %p77
    %p79 = scmp.ne.s32.totalorder %s65, %s66
    %p80 = scmp.eq.s32.totalorder %s16, 1
    %p81 = por %p79, %p80
    %p83 = scmp.ne.s32.totalorder %s66, %s82
    %p84 = scmp.eq.s32.totalorder %s16, 0
    %p85 = por %p83, %p84
    %s86 = ssub.s32 %s17, %s29
    %s87 = ssub.s32 %s18, %s25
    %s88 = sor.u32 %s86, %s87
    %p89 = scmp.eq.s32.totalorder %s88, 0
    %s91 = sadd.s32 %s90, 1
    %s92 = scalar_select %p89, %s90, %s91
    %p95 = pneg %p89
    %p96 = scmp.eq.s32.totalorder %s10, 1
    %p97 = por %p95, %p96
    %p98 = scmp.ne.s32.totalorder %s90, %s93
    %p99 = scmp.eq.s32.totalorder %s10, 0
    %p100 = por %p98, %p99
    %p101 = scmp.ne.s32.totalorder %s90, %s93
    %p102 = scmp.eq.s32.totalorder %s15, 1
    %p103 = por %p101, %p102
    %p104 = scmp.ne.s32.totalorder %s93, %s94
    %p105 = scmp.eq.s32.totalorder %s15, 0
    %p106 = por %p104, %p105
    %p107 = scmp.ne.s32.totalorder %s93, %s94
    %p108 = scmp.eq.s32.totalorder %s16, 1
    %p109 = por %p107, %p108
    %p111 = scmp.ne.s32.totalorder %s94, %s110
    %p112 = scmp.eq.s32.totalorder %s16, 0
    %p113 = por %p111, %p112
    %s114 = ssub.s32 %s17, %s29
    %p115 = scmp.eq.s32.totalorder %s114, 0
    %s117 = sadd.s32 %s116, 1
    %s118 = scalar_select %p115, %s116, %s117
    %p121 = pneg %p115
    %p122 = scmp.eq.s32.totalorder %s10, 1
    %p123 = por %p121, %p122
    %p124 = scmp.ne.s32.totalorder %s116, %s119
    %p125 = scmp.eq.s32.totalorder %s10, 0
    %p126 = por %p124, %p125
    %p127 = scmp.ne.s32.totalorder %s116, %s119
    %p128 = scmp.eq.s32.totalorder %s15, 1
    %p129 = por %p127, %p128
    %p130 = scmp.ne.s32.totalorder %s119, %s120
    %p131 = scmp.eq.s32.totalorder %s15, 0
    %p132 = por %p130, %p131
    %p133 = scmp.ne.s32.totalorder %s119, %s120
    %p134 = scmp.eq.s32.totalorder %s16, 1
    %p135 = por %p133, %p134
    %p137 = scmp.ne.s32.totalorder %s120, %s136
    %p138 = scmp.eq.s32.totalorder %s16, 0
    %p139 = por %p137, %p138
    %s140 = ssub.s32 %s17, %s29
    %s141 = ssub.s32 %s18, %s25
    %s142 = sor.u32 %s140, %s141
    %p143 = scmp.eq.s32.totalorder %s142, 0
    %s145 = sadd.s32 %s144, 1
    %s146 = scalar_select %p143, %s144, %s145
    %p149 = pneg %p143
    %p150 = scmp.eq.s32.totalorder %s10, 1
    %p151 = por %p149, %p150
    %p152 = scmp.ne.s32.totalorder %s144, %s147
    %p153 = scmp.eq.s32.totalorder %s10, 0
    %p154 = por %p152, %p153
    %p155 = scmp.ne.s32.totalorder %s144, %s147
    %p156 = scmp.eq.s32.totalorder %s15, 1
    %p157 = por %p155, %p156
    %p158 = scmp.ne.s32.totalorder %s147, %s148
    %p159 = scmp.eq.s32.totalorder %s15, 0
    %p160 = por %p158, %p159
    %p161 = scmp.ne.s32.totalorder %s147, %s148
    %p162 = scmp.eq.s32.totalorder %s16, 1
    %p163 = por %p161, %p162
    %p165 = scmp.ne.s32.totalorder %s148, %s164
    %p166 = scmp.eq.s32.totalorder %s16, 0
    %p167 = por %p165, %p166
    %p168 = scmp.le.s32.totalorder 1, %s10
    %p169 = scmp.lt.s32.totalorder %s10, 3
    %p170 = pnand %p168, %p169
    %p171 = pneg %p170
    // Predicated region
    $region9: #{forward.14} parent=5 // pred_check
      _
    $region10: #{forward.14} parent=5 // pred_check_branch
      %173 = sbr.rel (%p170) target = $region12
    $region11: #{forward.14} parent=5 // pred_region
      %s174 = ssub.s32 %s10, 1
    $region12: #{forward.14} parent=5 // pred_fallthru
      _
    %p175 = scmp.lt.s32.totalorder %s10, 2
    // Predicated region
    $region13: #{forward.14} parent=5 // pred_check
      %p176 = pneg %p175
    $region14: #{forward.14} parent=5 // pred_check_branch
      %178 = sbr.rel (%p176) target = $region16
    $region15: #{forward.14} parent=5 // pred_region
      // Predicated region
      $region17: #{forward.14} parent=15 // pred_check
        %p179 = pneg %p44
      $region18: #{forward.14} parent=15 // pred_check_branch
        %181 = sbr.rel (%p179) target = $region20
      $region19: #{forward.14} parent=15 // pred_region
        %p182 = scmp.lt.s32.totalorder %s17, 1
        %s183 = scalar_select %p182, %s17, 1
        %p184 = scmp.lt.s32.totalorder %s18, 0
        %s185 = scalar_select %p184, %s18, 0
        %s186 = sadd.s32 %s185, %s183
        %s187 = smul.addr %s186, 4
        %s188 = scalar_lea.vmem %s0, %s187
      $region20: #{forward.14} parent=15 // pred_fallthru
        _
      // Predicated region
      $region21: #{forward.14} parent=15 // pred_check
        %p189 = pneg %p72
      $region22: #{forward.14} parent=15 // pred_check_branch
        %191 = sbr.rel (%p189) target = $region24
      $region23: #{forward.14} parent=15 // pred_region
        %p192 = scmp.lt.s32.totalorder %s17, 1
        %s193 = scalar_select %p192, %s17, 1
        %p194 = scmp.lt.s32.totalorder %s18, 0
        %s195 = scalar_select %p194, %s18, 0
        %s196 = sadd.s32 %s195, %s193
        %s197 = smul.addr %s196, 4
        %s198 = scalar_lea.vmem %s1, %s197
      $region24: #{forward.14} parent=15 // pred_fallthru
        _
      // Predicated region
      $region25: #{forward.14} parent=15 // pred_check
        %p199 = pneg %p100
      $region26: #{forward.14} parent=15 // pred_check_branch
        %201 = sbr.rel (%p199) target = $region28
      $region27: #{forward.14} parent=15 // pred_region
        %p202 = scmp.lt.s32.totalorder %s17, 1
        %s203 = scalar_select %p202, %s17, 1
        %p204 = scmp.lt.s32.totalorder %s18, 0
        %s205 = scalar_select %p204, %s18, 0
        %s206 = sadd.s32 %s205, %s203
        %s207 = smul.addr %s206, 4
        %s208 = scalar_lea.vmem %s2, %s207
      $region28: #{forward.14} parent=15 // pred_fallthru
        _
      // Predicated region
      $region29: #{forward.14} parent=15 // pred_check
        %p209 = pneg %p126
      $region30: #{forward.14} parent=15 // pred_check_branch
        %211 = sbr.rel (%p209) target = $region32
      $region31: #{forward.14} parent=15 // pred_region
        %p212 = scmp.lt.s32.totalorder %s17, 1
        %s213 = scalar_select %p212, %s17, 1
        %s214 = scalar_lea.vmem %s3, %s213
      $region32: #{forward.14} parent=15 // pred_fallthru
        _
    $region16: #{forward.14} parent=5 // pred_fallthru
      _
    %p215 = scmp.le.s32.totalorder 1, %s10
    %p216 = scmp.lt.s32.totalorder %s10, 3
    %p217 = pnand %p215, %p216
    %p218 = pneg %p217
    // Predicated region
    $region33: #{forward.14} parent=5 // pred_check
      _
    $region34: #{forward.14} parent=5 // pred_check_branch
      %220 = sbr.rel (%p217) target = $region36
    $region35: #{forward.14} parent=5 // pred_region
      %s221 = ssub.s32 %s10, 1
      %p222 = scmp.lt.s32.totalorder %s19, 1
      %s223 = scalar_select %p222, %s19, 1
      %p224 = scmp.lt.s32.totalorder %s20, 0
      %s225 = scalar_select %p224, %s20, 0
      %s226 = sadd.s32 %s225, %s223
      %s227 = smul.addr %s226, 4
      %s228 = scalar_lea.vmem %s0, %s227
      %p229 = pneg %p50
      %p230 = pneg %p47
      %p231 = scmp.lt.s32.totalorder %s19, 1
      %s232 = scalar_select %p231, %s19, 1
      %p233 = scmp.lt.s32.totalorder %s20, 0
      %s234 = scalar_select %p233, %s20, 0
      %s235 = sadd.s32 %s234, %s232
      %s236 = smul.addr %s235, 4
      %s237 = scalar_lea.vmem %s1, %s236
      %p238 = pneg %p78
      %p239 = pneg %p75
      %p240 = scmp.lt.s32.totalorder %s19, 1
      %s241 = scalar_select %p240, %s19, 1
      %p242 = scmp.lt.s32.totalorder %s20, 0
      %s243 = scalar_select %p242, %s20, 0
      %s244 = sadd.s32 %s243, %s241
      %s245 = smul.addr %s244, 4
      %s246 = scalar_lea.vmem %s2, %s245
      %p247 = pneg %p106
      %p248 = pneg %p103
      %p249 = scmp.lt.s32.totalorder %s19, 1
      %s250 = scalar_select %p249, %s19, 1
      %s251 = scalar_lea.vmem %s3, %s250
      %p252 = pneg %p132
      %p253 = pneg %p129
      %p254 = pneg %p160
      %p255 = pneg %p157
      %p256 = scmp.lt.s32.totalorder %s19, 1
      %s257 = scalar_select %p256, %s19, 1
      %p258 = scmp.lt.s32.totalorder %s20, 0
      %s259 = scalar_select %p258, %s20, 0
      %s260 = sadd.s32 %s259, %s257
      %s261 = smul.addr %s260, 4
      %s262 = scalar_lea.vmem %s4, %s261
      %p263 = scmp.lt.s32.totalorder %s19, 1
      %s264 = scalar_select %p263, %s19, 1
      %p265 = scmp.lt.s32.totalorder %s20, 0
      %s266 = scalar_select %p265, %s20, 0
      %s267 = sadd.s32 %s266, %s264
      %s268 = smul.addr %s267, 4
      %s269 = scalar_lea.vmem %s0, %s268
      %p270 = scmp.lt.s32.totalorder %s19, 1
      %s271 = scalar_select %p270, %s19, 1
      %p272 = scmp.lt.s32.totalorder %s20, 0
      %s273 = scalar_select %p272, %s20, 0
      %s274 = sadd.s32 %s273, %s271
      %s275 = smul.addr %s274, 4
      %s276 = scalar_lea.vmem %s1, %s275
      %p277 = scmp.lt.s32.totalorder %s19, 1
      %s278 = scalar_select %p277, %s19, 1
      %p279 = scmp.lt.s32.totalorder %s20, 0
      %s280 = scalar_select %p279, %s20, 0
      %s281 = sadd.s32 %s280, %s278
      %s282 = smul.addr %s281, 4
      %s283 = scalar_lea.vmem %s2, %s282
      %p284 = scmp.lt.s32.totalorder %s19, 1
      %s285 = scalar_select %p284, %s19, 1
      %s286 = scalar_lea.vmem %s3, %s285
      %p287 = scmp.lt.s32.totalorder %s19, 1
      %s288 = scalar_select %p287, %s19, 1
      %p289 = scmp.lt.s32.totalorder %s20, 0
      %s290 = scalar_select %p289, %s20, 0
      %s291 = sadd.s32 %s290, %s288
      %s292 = smul.addr %s291, 4
      %s293 = scalar_lea.vmem %s4, %s292
      %v296 = vld [vmem:[%s286] sm:$0x1]
      %v297 = vld [vmem:[%s269] sm:$0xf]
      %v298 = vmul.bf16 %v297, 1052065461
      %v299 = vld [vmem:[%s276] sm:$0xf]
      %v300 = vld [vmem:[%s283] sm:$0xf]
      %v302 = vlaneseq
      %v303 = vshrl.u32 %v302, 7
      %v304 = vsub.s32 0, %v303
      %v305 = vrot.slane %v296, %v304
      %vm307 = vcmask 64512
      %v309 = vsel %vm307, %v298, 0
      %v312 = vsel %vm307, %v299, 0
      %314 = vmatprep.subr.bf16.mxu0 0
      %315 = vmatpush1.bf16.xpose.msra.mxu0 %v312
      %316 = vmatprep.subr.bf16.mxu0 0
      %317 = vmatpush1.bf16.xpose.msra.mxu0 0
      %318 = vmatprep.subr.bf16.mxu0 0
      %319 = vmatpush1.bf16.xpose.msra.mxu0 0
      %320 = vmatprep.subr.bf16.mxu0 0
      %321 = vmatpush1.bf16.xpose.msra.mxu0 0
      %322 = vmatprep.subr.bf16.mxu0 0
      %323 = vmatpush1.bf16.xpose.msra.mxu0 0
      %324 = vmatprep.subr.bf16.mxu0 0
      %325 = vmatpush1.bf16.xpose.msra.mxu0 0
      %326 = vmatprep.subr.bf16.mxu0 0
      %327 = vmatpush1.bf16.xpose.msra.mxu0 0
      %328 = vmatprep.subr.bf16.mxu0 0
      %329 = vmatpush1.bf16.xpose.msra.mxu0 0
      %330 = vmatprep.subr.bf16.mxu0 0
      %331 = vmatpush1.bf16.xpose.msra.mxu0 0
      %332 = vmatprep.subr.bf16.mxu0 0
      %333 = vmatpush1.bf16.xpose.msra.mxu0 0
      %334 = vmatprep.subr.bf16.mxu0 0
      %335 = vmatpush1.bf16.xpose.msra.mxu0 0
      %336 = vmatprep.subr.bf16.mxu0 0
      %337 = vmatpush1.bf16.xpose.msra.mxu0 0
      %338 = vmatprep.subr.bf16.mxu0 0
      %339 = vmatpush1.bf16.xpose.msra.mxu0 0
      %340 = vmatprep.subr.bf16.mxu0 0
      %341 = vmatpush1.bf16.xpose.msra.mxu0 0
      %342 = vmatprep.subr.bf16.mxu0 0
      %343 = vmatpush1.bf16.xpose.msra.mxu0 0
      %344 = vmatprep.subr.bf16.mxu0 0
      %345 = vmatpush1.bf16.xpose.msra.mxu0 0
      %346 = vmatprep.mubr.bf16.mxu0 0
      %347 = vmatmul.mubr.bf16.gmra.mrb[0].mxu0 %v309
      %v348 = vpop.f32.mrb[0].mxu0
      %v349 = vadd.f32 %v305, %v348
      %v350 = vpop.f32.mrb[0].mxu0
      %v351 = vpop.f32.mrb[0].mxu0
      %v352 = vpop.f32.mrb[0].mxu0
      %353 = vdwg.mxu0
      %v354 = vsel %vm307, %v349, -inf
      %355 = vmax.xlane.f32.xlu0 %v354
      %v356 = vpop.xlane.xlu0 %355
      %v357 = vsub.f32 %v349, %v356
      %v358 = vmul.f32 %v357, 1.442695
      %v359 = vpow.pop %v358
      %v360 = vsel %vm307, %v359, 0.0
      %361 = vadd.xlane.f32.xlu0 %v360
      %v362 = vpop.xlane.xlu0 %361
      %v363 = vrcp.pop %v362
      %v364 = vmul.f32 %v359, %v363
      %v365 = vpack.c.bf16 %v364, %v364
      %v367 = vsel %vm307, %v365, 0
      %vm369 = vcmask 1043456
      %v371 = vsel %vm369, %v300, 0
      %373 = vmatprep.subr.bf16.mxu0 0
      %374 = vmatpush1.bf16.msra.mxu0 %v371
      %375 = vmatprep.subr.bf16.mxu0 0
      %376 = vmatpush1.bf16.msra.mxu0 0
      %377 = vmatprep.subr.bf16.mxu0 0
      %378 = vmatpush1.bf16.msra.mxu0 0
      %379 = vmatprep.subr.bf16.mxu0 0
      %380 = vmatpush1.bf16.msra.mxu0 0
      %381 = vmatprep.subr.bf16.mxu0 0
      %382 = vmatpush1.bf16.msra.mxu0 0
      %383 = vmatprep.subr.bf16.mxu0 0
      %384 = vmatpush1.bf16.msra.mxu0 0
      %385 = vmatprep.subr.bf16.mxu0 0
      %386 = vmatpush1.bf16.msra.mxu0 0
      %387 = vmatprep.subr.bf16.mxu0 0
      %388 = vmatpush1.bf16.msra.mxu0 0
      %389 = vmatprep.subr.bf16.mxu0 0
      %390 = vmatpush1.bf16.msra.mxu0 0
      %391 = vmatprep.subr.bf16.mxu0 0
      %392 = vmatpush1.bf16.msra.mxu0 0
      %393 = vmatprep.subr.bf16.mxu0 0
      %394 = vmatpush1.bf16.msra.mxu0 0
      %395 = vmatprep.subr.bf16.mxu0 0
      %396 = vmatpush1.bf16.msra.mxu0 0
      %397 = vmatprep.subr.bf16.mxu0 0
      %398 = vmatpush1.bf16.msra.mxu0 0
      %399 = vmatprep.subr.bf16.mxu0 0
      %400 = vmatpush1.bf16.msra.mxu0 0
      %401 = vmatprep.subr.bf16.mxu0 0
      %402 = vmatpush1.bf16.msra.mxu0 0
      %403 = vmatprep.subr.bf16.mxu0 0
      %404 = vmatpush1.bf16.msra.mxu0 0
      %405 = vmatprep.mubr.bf16.mxu0 0
      %406 = vmatmul.mubr.bf16.gmra.mrb[0].mxu0 %v367
      %v407 = vpop.f32.mrb[0].mxu0
      %v408 = vadd.f32 0.0, %v407
      %v409 = vpop.f32.mrb[0].mxu0
      %v410 = vpop.f32.mrb[0].mxu0
      %v411 = vpop.f32.mrb[0].mxu0
      %412 = vdwg.mxu0
      %v414 = vunpack.c.l.b16 %v298
      %v415 = vpack.c.b16 %v414, %v414
      %416 = vrot.lane.b32.xlu0 %v415, 120
      %v417 = vpop.permute.xlu0 %416
      %v419 = vunpack.c.l.b16 %v299
      %v420 = vpack.c.b16 %v419, %v419
      %421 = vrot.lane.b32.xlu0 %v420, 120
      %v422 = vpop.permute.xlu0 %421
      %v424 = vsel %vm307, %v417, 0
      %v427 = vsel %vm307, %v422, 0
      %429 = vmatprep.subr.bf16.mxu0 0
      %430 = vmatpush1.bf16.xpose.msra.mxu0 %v427
      %431 = vmatprep.subr.bf16.mxu0 0
      %432 = vmatpush1.bf16.xpose.msra.mxu0 0
      %433 = vmatprep.subr.bf16.mxu0 0
      %434 = vmatpush1.bf16.xpose.msra.mxu0 0
      %435 = vmatprep.subr.bf16.mxu0 0
      %436 = vmatpush1.bf16.xpose.msra.mxu0 0
      %437 = vmatprep.subr.bf16.mxu0 0
      %438 = vmatpush1.bf16.xpose.msra.mxu0 0
      %439 = vmatprep.subr.bf16.mxu0 0
      %440 = vmatpush1.bf16.xpose.msra.mxu0 0
      %441 = vmatprep.subr.bf16.mxu0 0
      %442 = vmatpush1.bf16.xpose.msra.mxu0 0
      %443 = vmatprep.subr.bf16.mxu0 0
      %444 = vmatpush1.bf16.xpose.msra.mxu0 0
      %445 = vmatprep.subr.bf16.mxu0 0
      %446 = vmatpush1.bf16.xpose.msra.mxu0 0
      %447 = vmatprep.subr.bf16.mxu0 0
      %448 = vmatpush1.bf16.xpose.msra.mxu0 0
      %449 = vmatprep.subr.bf16.mxu0 0
      %450 = vmatpush1.bf16.xpose.msra.mxu0 0
      %451 = vmatprep.subr.bf16.mxu0 0
      %452 = vmatpush1.bf16.xpose.msra.mxu0 0
      %453 = vmatprep.subr.bf16.mxu0 0
      %454 = vmatpush1.bf16.xpose.msra.mxu0 0
      %455 = vmatprep.subr.bf16.mxu0 0
      %456 = vmatpush1.bf16.xpose.msra.mxu0 0
      %457 = vmatprep.subr.bf16.mxu0 0
      %458 = vmatpush1.bf16.xpose.msra.mxu0 0
      %459 = vmatprep.subr.bf16.mxu0 0
      %460 = vmatpush1.bf16.xpose.msra.mxu0 0
      %461 = vmatprep.mubr.bf16.mxu0 0
      %462 = vmatmul.mubr.bf16.gmra.mrb[0].mxu0 %v424
      %v463 = vpop.f32.mrb[0].mxu0
      %v464 = vadd.f32 %v305, %v463
      %v465 = vpop.f32.mrb[0].mxu0
      %v466 = vpop.f32.mrb[0].mxu0
      %v467 = vpop.f32.mrb[0].mxu0
      %468 = vdwg.mxu0
      %v469 = vsel %vm307, %v464, -inf
      %470 = vmax.xlane.f32.xlu0 %v469
      %v471 = vpop.xlane.xlu0 %470
      %v472 = vsub.f32 %v464, %v471
      %v473 = vmul.f32 %v472, 1.442695
      %v474 = vpow.pop %v473
      %v475 = vsel %vm307, %v474, 0.0
      %476 = vadd.xlane.f32.xlu0 %v475
      %v477 = vpop.xlane.xlu0 %476
      %v478 = vrcp.pop %v477
      %v479 = vmul.f32 %v474, %v478
      %v480 = vpack.c.bf16 %v479, %v479
      %v482 = vunpack.c.l.b16 %v300
      %v483 = vpack.c.b16 %v482, %v482
      %484 = vrot.lane.b32.xlu0 %v483, 120
      %v485 = vpop.permute.xlu0 %484
      %v487 = vsel %vm307, %v480, 0
      %v490 = vsel %vm369, %v485, 0
      %492 = vmatprep.subr.bf16.mxu0 0
      %493 = vmatpush1.bf16.msra.mxu0 %v490
      %494 = vmatprep.subr.bf16.mxu0 0
      %495 = vmatpush1.bf16.msra.mxu0 0
      %496 = vmatprep.subr.bf16.mxu0 0
      %497 = vmatpush1.bf16.msra.mxu0 0
      %498 = vmatprep.subr.bf16.mxu0 0
      %499 = vmatpush1.bf16.msra.mxu0 0
      %500 = vmatprep.subr.bf16.mxu0 0
      %501 = vmatpush1.bf16.msra.mxu0 0
      %502 = vmatprep.subr.bf16.mxu0 0
      %503 = vmatpush1.bf16.msra.mxu0 0
      %504 = vmatprep.subr.bf16.mxu0 0
      %505 = vmatpush1.bf16.msra.mxu0 0
      %506 = vmatprep.subr.bf16.mxu0 0
      %507 = vmatpush1.bf16.msra.mxu0 0
      %508 = vmatprep.subr.bf16.mxu0 0
      %509 = vmatpush1.bf16.msra.mxu0 0
      %510 = vmatprep.subr.bf16.mxu0 0
      %511 = vmatpush1.bf16.msra.mxu0 0
      %512 = vmatprep.subr.bf16.mxu0 0
      %513 = vmatpush1.bf16.msra.mxu0 0
      %514 = vmatprep.subr.bf16.mxu0 0
      %515 = vmatpush1.bf16.msra.mxu0 0
      %516 = vmatprep.subr.bf16.mxu0 0
      %517 = vmatpush1.bf16.msra.mxu0 0
      %518 = vmatprep.subr.bf16.mxu0 0
      %519 = vmatpush1.bf16.msra.mxu0 0
      %520 = vmatprep.subr.bf16.mxu0 0
      %521 = vmatpush1.bf16.msra.mxu0 0
      %522 = vmatprep.subr.bf16.mxu0 0
      %523 = vmatpush1.bf16.msra.mxu0 0
      %524 = vmatprep.mubr.bf16.mxu0 0
      %525 = vmatmul.mubr.bf16.gmra.mrb[0].mxu0 %v487
      %v526 = vpop.f32.mrb[0].mxu0
      %v527 = vadd.f32 0.0, %v526
      %v528 = vpop.f32.mrb[0].mxu0
      %v529 = vpop.f32.mrb[0].mxu0
      %v530 = vpop.f32.mrb[0].mxu0
      %531 = vdwg.mxu0
      %532 = vrot.lane.b32.xlu0 %v415, 112
      %v533 = vpop.permute.xlu0 %532
      %534 = vrot.lane.b32.xlu0 %v420, 112
      %v535 = vpop.permute.xlu0 %534
      %v537 = vsel %vm307, %v533, 0
      %v540 = vsel %vm307, %v535, 0
      %542 = vmatprep.subr.bf16.mxu0 0
      %543 = vmatpush1.bf16.xpose.msra.mxu0 %v540
      %544 = vmatprep.subr.bf16.mxu0 0
      %545 = vmatpush1.bf16.xpose.msra.mxu0 0
      %546 = vmatprep.subr.bf16.mxu0 0
      %547 = vmatpush1.bf16.xpose.msra.mxu0 0
      %548 = vmatprep.subr.bf16.mxu0 0
      %549 = vmatpush1.bf16.xpose.msra.mxu0 0
      %550 = vmatprep.subr.bf16.mxu0 0
      %551 = vmatpush1.bf16.xpose.msra.mxu0 0
      %552 = vmatprep.subr.bf16.mxu0 0
      %553 = vmatpush1.bf16.xpose.msra.mxu0 0
      %554 = vmatprep.subr.bf16.mxu0 0
      %555 = vmatpush1.bf16.xpose.msra.mxu0 0
      %556 = vmatprep.subr.bf16.mxu0 0
      %557 = vmatpush1.bf16.xpose.msra.mxu0 0
      %558 = vmatprep.subr.bf16.mxu0 0
      %559 = vmatpush1.bf16.xpose.msra.mxu0 0
      %560 = vmatprep.subr.bf16.mxu0 0
      %561 = vmatpush1.bf16.xpose.msra.mxu0 0
      %562 = vmatprep.subr.bf16.mxu0 0
      %563 = vmatpush1.bf16.xpose.msra.mxu0 0
      %564 = vmatprep.subr.bf16.mxu0 0
      %565 = vmatpush1.bf16.xpose.msra.mxu0 0
      %566 = vmatprep.subr.bf16.mxu0 0
      %567 = vmatpush1.bf16.xpose.msra.mxu0 0
      %568 = vmatprep.subr.bf16.mxu0 0
      %569 = vmatpush1.bf16.xpose.msra.mxu0 0
      %570 = vmatprep.subr.bf16.mxu0 0
      %571 = vmatpush1.bf16.xpose.msra.mxu0 0
      %572 = vmatprep.subr.bf16.mxu0 0
      %573 = vmatpush1.bf16.xpose.msra.mxu0 0
      %574 = vmatprep.mubr.bf16.mxu0 0
      %575 = vmatmul.mubr.bf16.gmra.mrb[0].mxu0 %v537
      %v576 = vpop.f32.mrb[0].mxu0
      %v577 = vadd.f32 %v305, %v576
      %v578 = vpop.f32.mrb[0].mxu0
      %v579 = vpop.f32.mrb[0].mxu0
      %v580 = vpop.f32.mrb[0].mxu0
      %581 = vdwg.mxu0
      %v582 = vsel %vm307, %v577, -inf
      %583 = vmax.xlane.f32.xlu0 %v582
      %v584 = vpop.xlane.xlu0 %583
      %v585 = vsub.f32 %v577, %v584
      %v586 = vmul.f32 %v585, 1.442695
      %v587 = vpow.pop %v586
      %v588 = vsel %vm307, %v587, 0.0
      %589 = vadd.xlane.f32.xlu0 %v588
      %v590 = vpop.xlane.xlu0 %589
      %v591 = vrcp.pop %v590
      %v592 = vmul.f32 %v587, %v591
      %v593 = vpack.c.bf16 %v592, %v592
      %594 = vrot.lane.b32.xlu0 %v483, 112
      %v595 = vpop.permute.xlu0 %594
      %v597 = vsel %vm307, %v593, 0
      %v600 = vsel %vm369, %v595, 0
      %602 = vmatprep.subr.bf16.mxu0 0
      %603 = vmatpush1.bf16.msra.mxu0 %v600
      %604 = vmatprep.subr.bf16.mxu0 0
      %605 = vmatpush1.bf16.msra.mxu0 0
      %606 = vmatprep.subr.bf16.mxu0 0
      %607 = vmatpush1.bf16.msra.mxu0 0
      %608 = vmatprep.subr.bf16.mxu0 0
      %609 = vmatpush1.bf16.msra.mxu0 0
      %610 = vmatprep.subr.bf16.mxu0 0
      %611 = vmatpush1.bf16.msra.mxu0 0
      %612 = vmatprep.subr.bf16.mxu0 0
      %613 = vmatpush1.bf16.msra.mxu0 0
      %614 = vmatprep.subr.bf16.mxu0 0
      %615 = vmatpush1.bf16.msra.mxu0 0
      %616 = vmatprep.subr.bf16.mxu0 0
      %617 = vmatpush1.bf16.msra.mxu0 0
      %618 = vmatprep.subr.bf16.mxu0 0
      %619 = vmatpush1.bf16.msra.mxu0 0
      %620 = vmatprep.subr.bf16.mxu0 0
      %621 = vmatpush1.bf16.msra.mxu0 0
      %622 = vmatprep.subr.bf16.mxu0 0
      %623 = vmatpush1.bf16.msra.mxu0 0
      %624 = vmatprep.subr.bf16.mxu0 0
      %625 = vmatpush1.bf16.msra.mxu0 0
      %626 = vmatprep.subr.bf16.mxu0 0
      %627 = vmatpush1.bf16.msra.mxu0 0
      %628 = vmatprep.subr.bf16.mxu0 0
      %629 = vmatpush1.bf16.msra.mxu0 0
      %630 = vmatprep.subr.bf16.mxu0 0
      %631 = vmatpush1.bf16.msra.mxu0 0
      %632 = vmatprep.subr.bf16.mxu0 0
      %633 = vmatpush1.bf16.msra.mxu0 0
      %634 = vmatprep.mubr.bf16.mxu0 0
      %635 = vmatmul.mubr.bf16.gmra.mrb[0].mxu0 %v597
      %v636 = vpop.f32.mrb[0].mxu0
      %v637 = vadd.f32 0.0, %v636
      %v638 = vpop.f32.mrb[0].mxu0
      %v639 = vpop.f32.mrb[0].mxu0
      %v640 = vpop.f32.mrb[0].mxu0
      %641 = vdwg.mxu0
      %642 = vrot.lane.b32.xlu0 %v415, 104
      %v643 = vpop.permute.xlu0 %642
      %644 = vrot.lane.b32.xlu0 %v420, 104
      %v645 = vpop.permute.xlu0 %644
      %v647 = vsel %vm307, %v643, 0
      %v650 = vsel %vm307, %v645, 0
      %652 = vmatprep.subr.bf16.mxu0 0
      %653 = vmatpush1.bf16.xpose.msra.mxu0 %v650
      %654 = vmatprep.subr.bf16.mxu0 0
      %655 = vmatpush1.bf16.xpose.msra.mxu0 0
      %656 = vmatprep.subr.bf16.mxu0 0
      %657 = vmatpush1.bf16.xpose.msra.mxu0 0
      %658 = vmatprep.subr.bf16.mxu0 0
      %659 = vmatpush1.bf16.xpose.msra.mxu0 0
      %660 = vmatprep.subr.bf16.mxu0 0
      %661 = vmatpush1.bf16.xpose.msra.mxu0 0
      %662 = vmatprep.subr.bf16.mxu0 0
      %663 = vmatpush1.bf16.xpose.msra.mxu0 0
      %664 = vmatprep.subr.bf16.mxu0 0
      %665 = vmatpush1.bf16.xpose.msra.mxu0 0
      %666 = vmatprep.subr.bf16.mxu0 0
      %667 = vmatpush1.bf16.xpose.msra.mxu0 0
      %668 = vmatprep.subr.bf16.mxu0 0
      %669 = vmatpush1.bf16.xpose.msra.mxu0 0
      %670 = vmatprep.subr.bf16.mxu0 0
      %671 = vmatpush1.bf16.xpose.msra.mxu0 0
      %672 = vmatprep.subr.bf16.mxu0 0
      %673 = vmatpush1.bf16.xpose.msra.mxu0 0
      %674 = vmatprep.subr.bf16.mxu0 0
      %675 = vmatpush1.bf16.xpose.msra.mxu0 0
      %676 = vmatprep.subr.bf16.mxu0 0
      %677 = vmatpush1.bf16.xpose.msra.mxu0 0
      %678 = vmatprep.subr.bf16.mxu0 0
      %679 = vmatpush1.bf16.xpose.msra.mxu0 0
      %680 = vmatprep.subr.bf16.mxu0 0
      %681 = vmatpush1.bf16.xpose.msra.mxu0 0
      %682 = vmatprep.subr.bf16.mxu0 0
      %683 = vmatpush1.bf16.xpose.msra.mxu0 0
      %684 = vmatprep.mubr.bf16.mxu0 0
      %685 = vmatmul.mubr.bf16.gmra.mrb[0].mxu0 %v647
      %v686 = vpop.f32.mrb[0].mxu0
      %v687 = vadd.f32 %v305, %v686
      %v688 = vpop.f32.mrb[0].mxu0
      %v689 = vpop.f32.mrb[0].mxu0
      %v690 = vpop.f32.mrb[0].mxu0
      %691 = vdwg.mxu0
      %v692 = vsel %vm307, %v687, -inf
      %693 = vmax.xlane.f32.xlu0 %v692
      %v694 = vpop.xlane.xlu0 %693
      %v695 = vsub.f32 %v687, %v694
      %v696 = vmul.f32 %v695, 1.442695
      %v697 = vpow.pop %v696
      %v698 = vsel %vm307, %v697, 0.0
      %699 = vadd.xlane.f32.xlu0 %v698
      %v700 = vpop.xlane.xlu0 %699
      %v701 = vrcp.pop %v700
      %v702 = vmul.f32 %v697, %v701
      %v703 = vpack.c.bf16 %v702, %v702
      %704 = vrot.lane.b32.xlu0 %v483, 104
      %v705 = vpop.permute.xlu0 %704
      %v707 = vsel %vm307, %v703, 0
      %v710 = vsel %vm369, %v705, 0
      %712 = vmatprep.subr.bf16.mxu0 0
      %713 = vmatpush1.bf16.msra.mxu0 %v710
      %714 = vmatprep.subr.bf16.mxu0 0
      %715 = vmatpush1.bf16.msra.mxu0 0
      %716 = vmatprep.subr.bf16.mxu0 0
      %717 = vmatpush1.bf16.msra.mxu0 0
      %718 = vmatprep.subr.bf16.mxu0 0
      %719 = vmatpush1.bf16.msra.mxu0 0
      %720 = vmatprep.subr.bf16.mxu0 0
      %721 = vmatpush1.bf16.msra.mxu0 0
      %722 = vmatprep.subr.bf16.mxu0 0
      %723 = vmatpush1.bf16.msra.mxu0 0
      %724 = vmatprep.subr.bf16.mxu0 0
      %725 = vmatpush1.bf16.msra.mxu0 0
      %726 = vmatprep.subr.bf16.mxu0 0
      %727 = vmatpush1.bf16.msra.mxu0 0
      %728 = vmatprep.subr.bf16.mxu0 0
      %729 = vmatpush1.bf16.msra.mxu0 0
      %730 = vmatprep.subr.bf16.mxu0 0
      %731 = vmatpush1.bf16.msra.mxu0 0
      %732 = vmatprep.subr.bf16.mxu0 0
      %733 = vmatpush1.bf16.msra.mxu0 0
      %734 = vmatprep.subr.bf16.mxu0 0
      %735 = vmatpush1.bf16.msra.mxu0 0
      %736 = vmatprep.subr.bf16.mxu0 0
      %737 = vmatpush1.bf16.msra.mxu0 0
      %738 = vmatprep.subr.bf16.mxu0 0
      %739 = vmatpush1.bf16.msra.mxu0 0
      %740 = vmatprep.subr.bf16.mxu0 0
      %741 = vmatpush1.bf16.msra.mxu0 0
      %742 = vmatprep.subr.bf16.mxu0 0
      %743 = vmatpush1.bf16.msra.mxu0 0
      %744 = vmatprep.mubr.bf16.mxu0 0
      %745 = vmatmul.mubr.bf16.gmra.mrb[0].mxu0 %v707
      %v746 = vpop.f32.mrb[0].mxu0
      %v747 = vadd.f32 0.0, %v746
      %v748 = vpop.f32.mrb[0].mxu0
      %v749 = vpop.f32.mrb[0].mxu0
      %v750 = vpop.f32.mrb[0].mxu0
      %751 = vdwg.mxu0
      %753 = vrot.lane.b32.xlu0 %v527, 8
      %v754 = vpop.permute.xlu0 %753
      %757 = vrot.lane.b32.xlu0 %v637, 16
      %v758 = vpop.permute.xlu0 %757
      %761 = vrot.lane.b32.xlu0 %v747, 24
      %v762 = vpop.permute.xlu0 %761
      %v764 = vsel %vm307, %v408, %v754
      %vm765 = vcmask 130048
      %v766 = vsel %vm765, %v764, %v758
      %vm767 = vcmask 195584
      %v768 = vsel %vm767, %v766, %v762
      %v769 = vpack.c.bf16 %v768, %v768
      %vm770 = vcmask 257024
      %771 = vst.msk [vmem:[%s293] sm:$0xf] %vm770, %v769
      %p772 = scmp.lt.s32.totalorder %s19, 1
      %s773 = scalar_select %p772, %s19, 1
      %p774 = scmp.lt.s32.totalorder %s20, 0
      %s775 = scalar_select %p774, %s20, 0
      %s776 = sadd.s32 %s775, %s773
      %s777 = smul.addr %s776, 4
      %s778 = scalar_lea.vmem %s4, %s777
      // Predicated region
      $region37: #{forward.14} parent=35 // pred_check
        %p779 = pneg %p157
      $region38: #{forward.14} parent=35 // pred_check_branch
        %781 = sbr.rel (%p779) target = $region40
      $region39: #{forward.14} parent=35 // pred_region
        _
      $region40: #{forward.14} parent=35 // pred_fallthru
        _
    $region36: #{forward.14} parent=5 // pred_fallthru
      _
    %p782 = scmp.le.s32.totalorder 2, %s10
    // Predicated region
    $region41: #{forward.14} parent=5 // pred_check
      %p783 = pneg %p782
    $region42: #{forward.14} parent=5 // pred_check_branch
      %785 = sbr.rel (%p783) target = $region44
    $region43: #{forward.14} parent=5 // pred_region
      %s786 = ssub.s32 %s10, 2
      // Predicated region
      $region45: #{forward.14} parent=43 // pred_check
        %p787 = pneg %p163
      $region46: #{forward.14} parent=43 // pred_check_branch
        %789 = sbr.rel (%p787) target = $region48
      $region47: #{forward.14} parent=43 // pred_region
        %p790 = scmp.lt.s32.totalorder %s21, 1
        %s791 = scalar_select %p790, %s21, 1
        %p792 = scmp.lt.s32.totalorder %s22, 0
        %s793 = scalar_select %p792, %s22, 0
        %s794 = sadd.s32 %s793, %s791
        %s795 = smul.addr %s794, 4
        %s796 = scalar_lea.vmem %s4, %s795
      $region48: #{forward.14} parent=43 // pred_fallthru
        _
    $region44: #{forward.14} parent=5 // pred_fallthru
      _
  $region6: #{forward.14} parent=0 // loop_footer
    %s14 = sadd.s32 1, %s10
  $region7: #{forward.14} parent=0 // loop_footer_branch
    %9 = sbr.rel target = $region3
  $region8: #{forward.14} parent=0 // loop_exit
    _

// kernel: forward.16
$region0: #{forward.16}
  #allocation0 [shape = 'u32[]', space=smem, size = 0x4, offset = 0x4, fixed_abs, tag = 'smem constant byte address 0x4 - core index']
  #allocation1 [shape = 'u32[144,128]{1,0:T(1,128)}', space=vmem, size = 0x12000, scoped, tag = 'internal scratch']
  #allocation2 [shape = 'f32[16,64]{1,0:T(8,128)}', space=vmem, size = 0x2000, scoped, tag = 'scratch operand']
  %s0 = inlined_call_operand.vmem [shape: bf16[16,32], index: 0, kind: input, shape index: {}]
  %s1 = inlined_call_operand.vmem [shape: bf16[32,64], index: 1, kind: input, shape index: {}]
  %s2 = inlined_call_operand.vmem [shape: f32[1,64], index: 2, kind: input, shape index: {}]
  %s3 = inlined_call_operand.vmem [shape: bf16[16,64], index: 3, kind: output, shape index: {}]
  %s4 = sld [smem:[#allocation0]]
  $region30: #{forward.16} parent=0
    _
  %s6 = ssub.s32 1, %s4
  %s7 = scalar_select 0, %s6, %s4
  // Predicated region
  $region2: #{forward.16} parent=0 // pred_check
    _
  $region3: #{forward.16} parent=0 // pred_check_branch
    %9 = sbr.rel (0) target = $region5
  $region4: #{forward.16} parent=0 // pred_region
    _
  $region5: #{forward.16} parent=0 // pred_fallthru
    _
  // Predicated region
  $region6: #{forward.16} parent=0 // pred_check
    _
  $region7: #{forward.16} parent=0 // pred_check_branch
    %11 = sbr.rel (0) target = $region9
  $region8: #{forward.16} parent=0 // pred_region
    _
  $region9: #{forward.16} parent=0 // pred_fallthru
    _
  // Predicated region
  $region10: #{forward.16} parent=0 // pred_check
    _
  $region11: #{forward.16} parent=0 // pred_check_branch
    %13 = sbr.rel (0) target = $region13
  $region12: #{forward.16} parent=0 // pred_region
    _
  $region13: #{forward.16} parent=0 // pred_fallthru
    _
  %p15 = scmp.eq.s32.totalorder 0, 0
  // Predicated region
  $region14: #{forward.16} parent=0 // pred_check
    %p16 = pneg %p15
  $region15: #{forward.16} parent=0 // pred_check_branch
    %18 = sbr.rel (%p16) target = $region17
  $region16: #{forward.16} parent=0 // pred_region
    %vm19 = vcmask 523264
    %20 = vst.msk [vmem:[#allocation2] sm:$0xff] %vm19, 0.0
    %21 = vst.msk [vmem:[#allocation2 + $0x8] sm:$0xff] %vm19, 0.0
  $region17: #{forward.16} parent=0 // pred_fallthru
    _
  %v22 = vld [vmem:[#allocation2] sm:$0xff]
  %v23 = vld [vmem:[#allocation2 + $0x8] sm:$0xff]
  %v24 = vld [vmem:[%s0] sm:$0xf]
  %v25 = vld [vmem:[%s0 + $0x4] sm:$0xf]
  %v26 = vld [vmem:[%s1] sm:$0xf]
  %v27 = vld [vmem:[%s1 + $0x4] sm:$0xf]
  %v28 = vld [vmem:[%s1 + $0x8] sm:$0xf]
  %v29 = vld [vmem:[%s1 + $0xc] sm:$0xf]
  %v32 = vunpack.c.l.b16 %v24
  %v33 = vunpack.c.l.b16 %v25
  %v34 = vpack.c.b16 %v33, %v32
  %v39 = vunpack.c.l.b16 %v26
  %v40 = vunpack.c.l.b16 %v27
  %v41 = vunpack.c.l.b16 %v28
  %v42 = vunpack.c.l.b16 %v29
  %v43 = vpack.c.b16 %v40, %v39
  %v44 = vpack.c.b16 %v42, %v41
  %vm47 = vcmask 261120
  %v49 = vsel %vm47, %v34, 0
  %51 = vmatprep.subr.bf16.mxu0 0
  %52 = vmatpush1.bf16.msra.mxu0 %v43
  %53 = vmatprep.subr.bf16.mxu0 0
  %54 = vmatpush1.bf16.msra.mxu0 %v44
  %55 = vmatprep.subr.bf16.mxu0 0
  %56 = vmatpush1.bf16.msra.mxu0 0
  %57 = vmatprep.subr.bf16.mxu0 0
  %58 = vmatpush1.bf16.msra.mxu0 0
  %59 = vmatprep.subr.bf16.mxu0 0
  %60 = vmatpush1.bf16.msra.mxu0 0
  %61 = vmatprep.subr.bf16.mxu0 0
  %62 = vmatpush1.bf16.msra.mxu0 0
  %63 = vmatprep.subr.bf16.mxu0 0
  %64 = vmatpush1.bf16.msra.mxu0 0
  %65 = vmatprep.subr.bf16.mxu0 0
  %66 = vmatpush1.bf16.msra.mxu0 0
  %67 = vmatprep.subr.bf16.mxu0 0
  %68 = vmatpush1.bf16.msra.mxu0 0
  %69 = vmatprep.subr.bf16.mxu0 0
  %70 = vmatpush1.bf16.msra.mxu0 0
  %71 = vmatprep.subr.bf16.mxu0 0
  %72 = vmatpush1.bf16.msra.mxu0 0
  %73 = vmatprep.subr.bf16.mxu0 0
  %74 = vmatpush1.bf16.msra.mxu0 0
  %75 = vmatprep.subr.bf16.mxu0 0
  %76 = vmatpush1.bf16.msra.mxu0 0
  %77 = vmatprep.subr.bf16.mxu0 0
  %78 = vmatpush1.bf16.msra.mxu0 0
  %79 = vmatprep.subr.bf16.mxu0 0
  %80 = vmatpush1.bf16.msra.mxu0 0
  %81 = vmatprep.subr.bf16.mxu0 0
  %82 = vmatpush1.bf16.msra.mxu0 0
  %83 = vmatprep.mubr.bf16.mxu0 0
  %84 = vmatmul.mubr.bf16.gmra.mrb[0].mxu0 %v49
  %v85 = vpop.f32.mrb[0].mxu0
  %v86 = vadd.f32 0.0, %v85
  %v87 = vpop.f32.mrb[0].mxu0
  %v88 = vpop.f32.mrb[0].mxu0
  %v89 = vadd.f32 0.0, %v88
  %v90 = vpop.f32.mrb[0].mxu0
  %91 = vdwg.mxu0
  %v92 = vadd.f32 %v22, %v86
  %v93 = vadd.f32 %v23, %v89
  %vm94 = vcmask 523264
  %95 = vst.msk [vmem:[#allocation2] sm:$0xff] %vm94, %v92
  %96 = vst.msk [vmem:[#allocation2 + $0x8] sm:$0xff] %vm94, %v93
  // Predicated region
  $region18: #{forward.16} parent=0 // pred_check
    %p97 = pneg %p15
  $region19: #{forward.16} parent=0 // pred_check_branch
    %99 = sbr.rel (%p97) target = $region21
  $region20: #{forward.16} parent=0 // pred_region
    %v100 = vld [vmem:[#allocation2] sm:$0xff]
    %v101 = vld [vmem:[#allocation2 + $0x8] sm:$0xff]
    %v102 = vld [vmem:[%s2] sm:$0x1]
    %v104 = vlaneseq
    %v105 = vshrl.u32 %v104, 7
    %v106 = vsub.s32 0, %v105
    %v107 = vrot.slane %v102, %v106
    %v109 = vadd.f32 %v100, %v107
    %v110 = vadd.f32 %v101, %v107
    %v111 = vmul.f32 %v109, 0.5
    %v112 = vmul.f32 %v110, 0.5
    %v113 = vmul.f32 %v109, 0.044715
    %v114 = vmul.f32 %v110, 0.044715
    %v115 = vmul.f32 %v113, %v109
    %v116 = vmul.f32 %v114, %v110
    %v117 = vmul.f32 %v115, %v109
    %v118 = vmul.f32 %v116, %v110
    %v119 = vadd.f32 %v109, %v117
    %v120 = vadd.f32 %v110, %v118
    %v121 = vmul.f32 %v119, 0.7978846
    %v122 = vmul.f32 %v120, 0.7978846
    %v123 = vtanh.pop %v121
    %v124 = vtanh.pop %v122
    %v125 = vadd.f32 %v123, 1.0
    %v126 = vadd.f32 %v124, 1.0
    %v127 = vmul.f32 %v111, %v125
    %v128 = vmul.f32 %v112, %v126
    %v129 = vpack.c.bf16 %v128, %v127
    %v131 = vunpack.c.l.b16 %v129
    %v132 = vunpack.c.h.b16 %v129
    %v133 = vpack.c.b16 %v131, %v131
    %v134 = vpack.c.b16 %v132, %v132
    %vm137 = vcmask 519168
    %138 = vst.msk [vmem:[%s3] sm:$0xf] %vm137, %v133
    %139 = vst.msk [vmem:[%s3 + $0x4] sm:$0xf] %vm137, %v134
  $region21: #{forward.16} parent=0 // pred_fallthru
    _
  // Predicated region
  $region22: #{forward.16} parent=0 // pred_check
    _
  $region23: #{forward.16} parent=0 // pred_check_branch
    %141 = sbr.rel (0) target = $region25
  $region24: #{forward.16} parent=0 // pred_region
    _
  $region25: #{forward.16} parent=0 // pred_fallthru
    _
  // Predicated region
  $region26: #{forward.16} parent=0 // pred_check
    _
  $region27: #{forward.16} parent=0 // pred_check_branch
    %143 = sbr.rel (0) target = $region29
  $region28: #{forward.16} parent=0 // pred_region
    _
  $region29: #{forward.16} parent=0 // pred_fallthru
    _

// kernel: forward.23
$region0: #{forward.23}
  #allocation0 [shape = 'u32[]', space=smem, size = 0x4, offset = 0x4, fixed_abs, tag = 'smem constant byte address 0x4 - core index']
  #allocation1 [shape = 'u32[144,128]{1,0:T(1,128)}', space=vmem, size = 0x12000, scoped, tag = 'internal scratch']
  %s0 = inlined_call_operand.vmem [shape: bf16[2,8,32], index: 0, kind: input, shape index: {}]
  %s1 = inlined_call_operand.vmem [shape: bf16[2,3,8], index: 1, kind: input, shape index: {}]
  %s2 = inlined_call_operand.vmem [shape: bf16[2,3,8], index: 2, kind: input, shape index: {}]
  %s3 = inlined_call_operand.vmem [shape: f32[2,3,64], index: 3, kind: output, shape index: {}]
  %s4 = sld [smem:[#allocation0]]
  $region45: #{forward.23} parent=0
    _
  %s6 = ssub.s32 1, %s4
  %s7 = scalar_select 0, %s6, %s4
  loop: start=0, step=1, limit=4
  $region2: #{forward.23} parent=0 // loop_pre_header
    _
  $region3: #{forward.23} parent=0 // loop_header
    %s9 = sphi 0, %s13
    %p10 = scmp.ge.s32.totalorder %s9, 4
    %s19 = sphi 0, %s21
    %s22 = sphi 0, %s19
    %s23 = sphi 0, %s22
    %s39 = sphi 0, %s23
    %s45 = sphi 0, %s47
    %s48 = sphi 0, %s45
    %s49 = sphi 0, %s48
    %s65 = sphi 0, %s49
    %s71 = sphi 0, %s73
    %s74 = sphi 0, %s71
    %s75 = sphi 0, %s74
    %s91 = sphi 0, %s75
    %s97 = sphi 0, %s99
    %s100 = sphi 0, %s97
    %s101 = sphi 0, %s100
    %s117 = sphi 0, %s101
  $region4: #{forward.23} parent=0 // loop_header_branch
    %12 = sbr.rel (%p10) target = $region8
  $region5: #{forward.23} parent=0 // loop_body
    %s14 = ssub.s32 %s9, 1
    %s15 = ssub.s32 %s9, 2
    %s16 = sadd.s32 %s9, 1
    %s17 = ssub.s32 %s9, %s16
    %p18 = scmp.eq.s32.totalorder %s17, 0
    %s20 = sadd.s32 %s19, 1
    %s21 = scalar_select %p18, %s19, %s20
    %p24 = pneg %p18
    %p25 = scmp.eq.s32.totalorder %s9, 1
    %p26 = por %p24, %p25
    %p27 = scmp.ne.s32.totalorder %s19, %s22
    %p28 = scmp.eq.s32.totalorder %s9, 0
    %p29 = por %p27, %p28
    %p30 = scmp.ne.s32.totalorder %s19, %s22
    %p31 = scmp.eq.s32.totalorder %s14, 1
    %p32 = por %p30, %p31
    %p33 = scmp.ne.s32.totalorder %s22, %s23
    %p34 = scmp.eq.s32.totalorder %s14, 0
    %p35 = por %p33, %p34
    %p36 = scmp.ne.s32.totalorder %s22, %s23
    %p37 = scmp.eq.s32.totalorder %s15, 1
    %p38 = por %p36, %p37
    %p40 = scmp.ne.s32.totalorder %s23, %s39
    %p41 = scmp.eq.s32.totalorder %s15, 0
    %p42 = por %p40, %p41
    %s43 = ssub.s32 %s9, %s16
    %p44 = scmp.eq.s32.totalorder %s43, 0
    %s46 = sadd.s32 %s45, 1
    %s47 = scalar_select %p44, %s45, %s46
    %p50 = pneg %p44
    %p51 = scmp.eq.s32.totalorder %s9, 1
    %p52 = por %p50, %p51
    %p53 = scmp.ne.s32.totalorder %s45, %s48
    %p54 = scmp.eq.s32.totalorder %s9, 0
    %p55 = por %p53, %p54
    %p56 = scmp.ne.s32.totalorder %s45, %s48
    %p57 = scmp.eq.s32.totalorder %s14, 1
    %p58 = por %p56, %p57
    %p59 = scmp.ne.s32.totalorder %s48, %s49
    %p60 = scmp.eq.s32.totalorder %s14, 0
    %p61 = por %p59, %p60
    %p62 = scmp.ne.s32.totalorder %s48, %s49
    %p63 = scmp.eq.s32.totalorder %s15, 1
    %p64 = por %p62, %p63
    %p66 = scmp.ne.s32.totalorder %s49, %s65
    %p67 = scmp.eq.s32.totalorder %s15, 0
    %p68 = por %p66, %p67
    %s69 = ssub.s32 %s9, %s16
    %p70 = scmp.eq.s32.totalorder %s69, 0
    %s72 = sadd.s32 %s71, 1
    %s73 = scalar_select %p70, %s71, %s72
    %p76 = pneg %p70
    %p77 = scmp.eq.s32.totalorder %s9, 1
    %p78 = por %p76, %p77
    %p79 = scmp.ne.s32.totalorder %s71, %s74
    %p80 = scmp.eq.s32.totalorder %s9, 0
    %p81 = por %p79, %p80
    %p82 = scmp.ne.s32.totalorder %s71, %s74
    %p83 = scmp.eq.s32.totalorder %s14, 1
    %p84 = por %p82, %p83
    %p85 = scmp.ne.s32.totalorder %s74, %s75
    %p86 = scmp.eq.s32.totalorder %s14, 0
    %p87 = por %p85, %p86
    %p88 = scmp.ne.s32.totalorder %s74, %s75
    %p89 = scmp.eq.s32.totalorder %s15, 1
    %p90 = por %p88, %p89
    %p92 = scmp.ne.s32.totalorder %s75, %s91
    %p93 = scmp.eq.s32.totalorder %s15, 0
    %p94 = por %p92, %p93
    %s95 = ssub.s32 %s9, %s16
    %p96 = scmp.eq.s32.totalorder %s95, 0
    %s98 = sadd.s32 %s97, 1
    %s99 = scalar_select %p96, %s97, %s98
    %p102 = pneg %p96
    %p103 = scmp.eq.s32.totalorder %s9, 1
    %p104 = por %p102, %p103
    %p105 = scmp.ne.s32.totalorder %s97, %s100
    %p106 = scmp.eq.s32.totalorder %s9, 0
    %p107 = por %p105, %p106
    %p108 = scmp.ne.s32.totalorder %s97, %s100
    %p109 = scmp.eq.s32.totalorder %s14, 1
    %p110 = por %p108, %p109
    %p111 = scmp.ne.s32.totalorder %s100, %s101
    %p112 = scmp.eq.s32.totalorder %s14, 0
    %p113 = por %p111, %p112
    %p114 = scmp.ne.s32.totalorder %s100, %s101
    %p115 = scmp.eq.s32.totalorder %s15, 1
    %p116 = por %p114, %p115
    %p118 = scmp.ne.s32.totalorder %s101, %s117
    %p119 = scmp.eq.s32.totalorder %s15, 0
    %p120 = por %p118, %p119
    %p121 = scmp.le.s32.totalorder 1, %s9
    %p122 = scmp.lt.s32.totalorder %s9, 3
    %p123 = pnand %p121, %p122
    %p124 = pneg %p123
    // Predicated region
    $region9: #{forward.23} parent=5 // pred_check
      _
    $region10: #{forward.23} parent=5 // pred_check_branch
      %126 = sbr.rel (%p123) target = $region12
    $region11: #{forward.23} parent=5 // pred_region
      %s127 = ssub.s32 %s9, 1
    $region12: #{forward.23} parent=5 // pred_fallthru
      _
    %p128 = scmp.lt.s32.totalorder %s9, 2
    // Predicated region
    $region13: #{forward.23} parent=5 // pred_check
      %p129 = pneg %p128
    $region14: #{forward.23} parent=5 // pred_check_branch
      %131 = sbr.rel (%p129) target = $region16
    $region15: #{forward.23} parent=5 // pred_region
      // Predicated region
      $region17: #{forward.23} parent=15 // pred_check
        %p132 = pneg %p29
      $region18: #{forward.23} parent=15 // pred_check_branch
        %134 = sbr.rel (%p132) target = $region20
      $region19: #{forward.23} parent=15 // pred_region
        %p135 = scmp.lt.s32.totalorder %s9, 1
        %s136 = scalar_select %p135, %s9, 1
        %s137 = smul.addr %s136, 4
        %s138 = scalar_lea.vmem %s0, %s137
      $region20: #{forward.23} parent=15 // pred_fallthru
        _
      // Predicated region
      $region21: #{forward.23} parent=15 // pred_check
        %p139 = pneg %p55
      $region22: #{forward.23} parent=15 // pred_check_branch
        %141 = sbr.rel (%p139) target = $region24
      $region23: #{forward.23} parent=15 // pred_region
        %p142 = scmp.lt.s32.totalorder %s9, 1
        %s143 = scalar_select %p142, %s9, 1
        %s144 = smul.addr %s143, 2
        %s145 = scalar_lea.vmem %s1, %s144
      $region24: #{forward.23} parent=15 // pred_fallthru
        _
      // Predicated region
      $region25: #{forward.23} parent=15 // pred_check
        %p146 = pneg %p81
      $region26: #{forward.23} parent=15 // pred_check_branch
        %148 = sbr.rel (%p146) target = $region28
      $region27: #{forward.23} parent=15 // pred_region
        %p149 = scmp.lt.s32.totalorder %s9, 1
        %s150 = scalar_select %p149, %s9, 1
        %s151 = smul.addr %s150, 2
        %s152 = scalar_lea.vmem %s2, %s151
      $region28: #{forward.23} parent=15 // pred_fallthru
        _
    $region16: #{forward.23} parent=5 // pred_fallthru
      _
    %p153 = scmp.le.s32.totalorder 1, %s9
    %p154 = scmp.lt.s32.totalorder %s9, 3
    %p155 = pnand %p153, %p154
    %p156 = pneg %p155
    // Predicated region
    $region29: #{forward.23} parent=5 // pred_check
      _
    $region30: #{forward.23} parent=5 // pred_check_branch
      %158 = sbr.rel (%p155) target = $region32
    $region31: #{forward.23} parent=5 // pred_region
      %s159 = ssub.s32 %s9, 1
      %p160 = scmp.lt.s32.totalorder %s14, 1
      %s161 = scalar_select %p160, %s14, 1
      %s162 = smul.addr %s161, 4
      %s163 = scalar_lea.vmem %s0, %s162
      %p164 = pneg %p35
      %p165 = pneg %p32
      %p166 = scmp.lt.s32.totalorder %s14, 1
      %s167 = scalar_select %p166, %s14, 1
      %s168 = smul.addr %s167, 2
      %s169 = scalar_lea.vmem %s1, %s168
      %p170 = pneg %p61
      %p171 = pneg %p58
      %p172 = scmp.lt.s32.totalorder %s14, 1
      %s173 = scalar_select %p172, %s14, 1
      %s174 = smul.addr %s173, 2
      %s175 = scalar_lea.vmem %s2, %s174
      %p176 = pneg %p87
      %p177 = pneg %p84
      %p178 = pneg %p113
      %p179 = pneg %p110
      %p180 = scmp.lt.s32.totalorder %s14, 1
      %s181 = scalar_select %p180, %s14, 1
      %s182 = smul.addr %s181, 4
      %s183 = scalar_lea.vmem %s3, %s182
      %p184 = scmp.lt.s32.totalorder %s14, 1
      %s185 = scalar_select %p184, %s14, 1
      %s186 = smul.addr %s185, 4
      %s187 = scalar_lea.vmem %s0, %s186
      %p188 = scmp.lt.s32.totalorder %s14, 1
      %s189 = scalar_select %p188, %s14, 1
      %s190 = smul.addr %s189, 2
      %s191 = scalar_lea.vmem %s1, %s190
      %p192 = scmp.lt.s32.totalorder %s14, 1
      %s193 = scalar_select %p192, %s14, 1
      %s194 = smul.addr %s193, 2
      %s195 = scalar_lea.vmem %s2, %s194
      %p196 = scmp.lt.s32.totalorder %s14, 1
      %s197 = scalar_select %p196, %s14, 1
      %s198 = smul.addr %s197, 4
      %s199 = scalar_lea.vmem %s3, %s198
      %v201 = vld [vmem:[%s187] sm:$0xf]
      %v202 = vld [vmem:[%s191] sm:$0x3]
      %vm203 = vcmask 64512
      %v205 = vsel %vm203, %v202, 0
      %vm207 = vcmask 1043456
      %v209 = vsel %vm207, %v201, 0
      %211 = vmatprep.subr.bf16.mxu0 0
      %212 = vmatpush1.bf16.msra.mxu0 %v209
      %213 = vmatprep.subr.bf16.mxu0 0
      %214 = vmatpush1.bf16.msra.mxu0 0
      %215 = vmatprep.subr.bf16.mxu0 0
      %216 = vmatpush1.bf16.msra.mxu0 0
      %217 = vmatprep.subr.bf16.mxu0 0
      %218 = vmatpush1.bf16.msra.mxu0 0
      %219 = vmatprep.subr.bf16.mxu0 0
      %220 = vmatpush1.bf16.msra.mxu0 0
      %221 = vmatprep.subr.bf16.mxu0 0
      %222 = vmatpush1.bf16.msra.mxu0 0
      %223 = vmatprep.subr.bf16.mxu0 0
      %224 = vmatpush1.bf16.msra.mxu0 0
      %225 = vmatprep.subr.bf16.mxu0 0
      %226 = vmatpush1.bf16.msra.mxu0 0
      %227 = vmatprep.subr.bf16.mxu0 0
      %228 = vmatpush1.bf16.msra.mxu0 0
      %229 = vmatprep.subr.bf16.mxu0 0
      %230 = vmatpush1.bf16.msra.mxu0 0
      %231 = vmatprep.subr.bf16.mxu0 0
      %232 = vmatpush1.bf16.msra.mxu0 0
      %233 = vmatprep.subr.bf16.mxu0 0
      %234 = vmatpush1.bf16.msra.mxu0 0
      %235 = vmatprep.subr.bf16.mxu0 0
      %236 = vmatpush1.bf16.msra.mxu0 0
      %237 = vmatprep.subr.bf16.mxu0 0
      %238 = vmatpush1.bf16.msra.mxu0 0
      %239 = vmatprep.subr.bf16.mxu0 0
      %240 = vmatpush1.bf16.msra.mxu0 0
      %241 = vmatprep.subr.bf16.mxu0 0
      %242 = vmatpush1.bf16.msra.mxu0 0
      %243 = vmatprep.mubr.bf16.mxu0 0
      %244 = vmatmul.mubr.bf16.gmra.mrb[0].mxu0 %v205
      %v245 = vpop.f32.mrb[0].mxu0
      %v246 = vadd.f32 0.0, %v245
      %v247 = vpop.f32.mrb[0].mxu0
      %v248 = vpop.f32.mrb[0].mxu0
      %v249 = vpop.f32.mrb[0].mxu0
      %250 = vdwg.mxu0
      %v251 = vld [vmem:[%s195] sm:$0x3]
      %v253 = vsel %vm203, %v251, 0
      %255 = vmatprep.subr.bf16.mxu0 0
      %256 = vmatpush1.bf16.msra.mxu0 %v209
      %257 = vmatprep.subr.bf16.mxu0 0
      %258 = vmatpush1.bf16.msra.mxu0 0
      %259 = vmatprep.subr.bf16.mxu0 0
      %260 = vmatpush1.bf16.msra.mxu0 0
      %261 = vmatprep.subr.bf16.mxu0 0
      %262 = vmatpush1.bf16.msra.mxu0 0
      %263 = vmatprep.subr.bf16.mxu0 0
      %264 = vmatpush1.bf16.msra.mxu0 0
      %265 = vmatprep.subr.bf16.mxu0 0
      %266 = vmatpush1.bf16.msra.mxu0 0
      %267 = vmatprep.subr.bf16.mxu0 0
      %268 = vmatpush1.bf16.msra.mxu0 0
      %269 = vmatprep.subr.bf16.mxu0 0
      %270 = vmatpush1.bf16.msra.mxu0 0
      %271 = vmatprep.subr.bf16.mxu0 0
      %272 = vmatpush1.bf16.msra.mxu0 0
      %273 = vmatprep.subr.bf16.mxu0 0
      %274 = vmatpush1.bf16.msra.mxu0 0
      %275 = vmatprep.subr.bf16.mxu0 0
      %276 = vmatpush1.bf16.msra.mxu0 0
      %277 = vmatprep.subr.bf16.mxu0 0
      %278 = vmatpush1.bf16.msra.mxu0 0
      %279 = vmatprep.subr.bf16.mxu0 0
      %280 = vmatpush1.bf16.msra.mxu0 0
      %281 = vmatprep.subr.bf16.mxu0 0
      %282 = vmatpush1.bf16.msra.mxu0 0
      %283 = vmatprep.subr.bf16.mxu0 0
      %284 = vmatpush1.bf16.msra.mxu0 0
      %285 = vmatprep.subr.bf16.mxu0 0
      %286 = vmatpush1.bf16.msra.mxu0 0
      %287 = vmatprep.mubr.bf16.mxu0 0
      %288 = vmatmul.mubr.bf16.gmra.mrb[0].mxu0 %v253
      %v289 = vpop.f32.mrb[0].mxu0
      %v290 = vadd.f32 0.0, %v289
      %v291 = vpop.f32.mrb[0].mxu0
      %v292 = vpop.f32.mrb[0].mxu0
      %v293 = vpop.f32.mrb[0].mxu0
      %294 = vdwg.mxu0
      %vm295 = vcmask 256000
      %296 = vst.msk [vmem:[%s199] sm:$0x7] %vm295, %v246
      %298 = vrot.lane.b32.xlu0 %v290, 32
      %v299 = vpop.permute.xlu0 %298
      %vm301 = vcmask 518400
      %302 = vst.msk [vmem:[%s199] sm:$0x7] %vm301, %v299
      %p303 = scmp.lt.s32.totalorder %s14, 1
      %s304 = scalar_select %p303, %s14, 1
      %s305 = smul.addr %s304, 4
      %s306 = scalar_lea.vmem %s3, %s305
      // Predicated region
      $region33: #{forward.23} parent=31 // pred_check
        %p307 = pneg %p110
      $region34: #{forward.23} parent=31 // pred_check_branch
        %309 = sbr.rel (%p307) target = $region36
      $region35: #{forward.23} parent=31 // pred_region
        _
      $region36: #{forward.23} parent=31 // pred_fallthru
        _
    $region32: #{forward.23} parent=5 // pred_fallthru
      _
    %p310 = scmp.le.s32.totalorder 2, %s9
    // Predicated region
    $region37: #{forward.23} parent=5 // pred_check
      %p311 = pneg %p310
    $region38: #{forward.23} parent=5 // pred_check_branch
      %313 = sbr.rel (%p311) target = $region40
    $region39: #{forward.23} parent=5 // pred_region
      %s314 = ssub.s32 %s9, 2
      // Predicated region
      $region41: #{forward.23} parent=39 // pred_check
        %p315 = pneg %p116
      $region42: #{forward.23} parent=39 // pred_check_branch
        %317 = sbr.rel (%p315) target = $region44
      $region43: #{forward.23} parent=39 // pred_region
        %p318 = scmp.lt.s32.totalorder %s15, 1
        %s319 = scalar_select %p318, %s15, 1
        %s320 = smul.addr %s319, 4
        %s321 = scalar_lea.vmem %s3, %s320
      $region44: #{forward.23} parent=39 // pred_fallthru
        _
    $region40: #{forward.23} parent=5 // pred_fallthru
      _
  $region6: #{forward.23} parent=0 // loop_footer
    %s13 = sadd.s32 1, %s9
  $region7: #{forward.23} parent=0 // loop_footer_branch
    %8 = sbr.rel target = $region3
  $region8: #{forward.23} parent=0 // loop_exit
    _

// kernel: forward.17
$region0: #{forward.17}
  #allocation0 [shape = 'u32[]', space=smem, size = 0x4, offset = 0x4, fixed_abs, tag = 'smem constant byte address 0x4 - core index']
  #allocation1 [shape = 'u32[144,128]{1,0:T(1,128)}', space=vmem, size = 0x12000, scoped, tag = 'internal scratch']
  #allocation2 [shape = 'f32[16,32]{1,0:T(8,128)}', space=vmem, size = 0x2000, scoped, tag = 'scratch operand']
  %s0 = inlined_call_operand.vmem [shape: bf16[16,64], index: 0, kind: input, shape index: {}]
  %s1 = inlined_call_operand.vmem [shape: bf16[64,32], index: 1, kind: input, shape index: {}]
  %s2 = inlined_call_operand.vmem [shape: f32[1,32], index: 2, kind: input, shape index: {}]
  %s3 = inlined_call_operand.vmem [shape: bf16[16,32], index: 3, kind: input, shape index: {}]
  %s4 = inlined_call_operand.vmem [shape: f32[1,32], index: 4, kind: input, shape index: {}]
  %s5 = inlined_call_operand.vmem [shape: f32[1,32], index: 5, kind: input, shape index: {}]
  %s6 = inlined_call_operand.vmem [shape: bf16[16,32], index: 6, kind: output, shape index: {}]
  %s7 = sld [smem:[#allocation0]]
  $region42: #{forward.17} parent=0
    _
  %s9 = ssub.s32 1, %s7
  %s10 = scalar_select 0, %s9, %s7
  // Predicated region
  $region2: #{forward.17} parent=0 // pred_check
    _
  $region3: #{forward.17} parent=0 // pred_check_branch
    %12 = sbr.rel (0) target = $region5
  $region4: #{forward.17} parent=0 // pred_region
    _
  $region5: #{forward.17} parent=0 // pred_fallthru
    _
  // Predicated region
  $region6: #{forward.17} parent=0 // pred_check
    _
  $region7: #{forward.17} parent=0 // pred_check_branch
    %14 = sbr.rel (0) target = $region9
  $region8: #{forward.17} parent=0 // pred_region
    _
  $region9: #{forward.17} parent=0 // pred_fallthru
    _
  // Predicated region
  $region10: #{forward.17} parent=0 // pred_check
    _
  $region11: #{forward.17} parent=0 // pred_check_branch
    %16 = sbr.rel (0) target = $region13
  $region12: #{forward.17} parent=0 // pred_region
    _
  $region13: #{forward.17} parent=0 // pred_fallthru
    _
  // Predicated region
  $region14: #{forward.17} parent=0 // pred_check
    _
  $region15: #{forward.17} parent=0 // pred_check_branch
    %18 = sbr.rel (0) target = $region17
  $region16: #{forward.17} parent=0 // pred_region
    _
  $region17: #{forward.17} parent=0 // pred_fallthru
    _
  // Predicated region
  $region18: #{forward.17} parent=0 // pred_check
    _
  $region19: #{forward.17} parent=0 // pred_check_branch
    %20 = sbr.rel (0) target = $region21
  $region20: #{forward.17} parent=0 // pred_region
    _
  $region21: #{forward.17} parent=0 // pred_fallthru
    _
  // Predicated region
  $region22: #{forward.17} parent=0 // pred_check
    _
  $region23: #{forward.17} parent=0 // pred_check_branch
    %22 = sbr.rel (0) target = $region25
  $region24: #{forward.17} parent=0 // pred_region
    _
  $region25: #{forward.17} parent=0 // pred_fallthru
    _
  %p24 = scmp.eq.s32.totalorder 0, 0
  // Predicated region
  $region26: #{forward.17} parent=0 // pred_check
    %p25 = pneg %p24
  $region27: #{forward.17} parent=0 // pred_check_branch
    %27 = sbr.rel (%p25) target = $region29
  $region28: #{forward.17} parent=0 // pred_region
    %vm28 = vcmask 261120
    %29 = vst.msk [vmem:[#allocation2] sm:$0xff] %vm28, 0.0
    %30 = vst.msk [vmem:[#allocation2 + $0x8] sm:$0xff] %vm28, 0.0
  $region29: #{forward.17} parent=0 // pred_fallthru
    _
  %v31 = vld [vmem:[#allocation2] sm:$0xff]
  %v32 = vld [vmem:[#allocation2 + $0x8] sm:$0xff]
  %v33 = vld [vmem:[%s0] sm:$0xf]
  %v34 = vld [vmem:[%s0 + $0x4] sm:$0xf]
  %v35 = vld [vmem:[%s1] sm:$0xf]
  %v36 = vld [vmem:[%s1 + $0x4] sm:$0xf]
  %v37 = vld [vmem:[%s1 + $0x8] sm:$0xf]
  %v38 = vld [vmem:[%s1 + $0xc] sm:$0xf]
  %v39 = vld [vmem:[%s1 + $0x10] sm:$0xf]
  %v40 = vld [vmem:[%s1 + $0x14] sm:$0xf]
  %v41 = vld [vmem:[%s1 + $0x18] sm:$0xf]
  %v42 = vld [vmem:[%s1 + $0x1c] sm:$0xf]
  %v45 = vunpack.c.l.b16 %v33
  %v46 = vunpack.c.l.b16 %v34
  %v47 = vpack.c.b16 %v46, %v45
  %v56 = vunpack.c.l.b16 %v35
  %v57 = vunpack.c.l.b16 %v36
  %v58 = vunpack.c.l.b16 %v37
  %v59 = vunpack.c.l.b16 %v38
  %v60 = vunpack.c.l.b16 %v39
  %v61 = vunpack.c.l.b16 %v40
  %v62 = vunpack.c.l.b16 %v41
  %v63 = vunpack.c.l.b16 %v42
  %v64 = vpack.c.b16 %v57, %v56
  %v65 = vpack.c.b16 %v59, %v58
  %v66 = vpack.c.b16 %v61, %v60
  %v67 = vpack.c.b16 %v63, %v62
  %vm72 = vcmask 523264
  %v74 = vsel %vm72, %v47, 0
  %76 = vmatprep.subr.bf16.mxu0 0
  %77 = vmatpush1.bf16.msra.mxu0 %v64
  %78 = vmatprep.subr.bf16.mxu0 0
  %79 = vmatpush1.bf16.msra.mxu0 %v65
  %80 = vmatprep.subr.bf16.mxu0 0
  %81 = vmatpush1.bf16.msra.mxu0 %v66
  %82 = vmatprep.subr.bf16.mxu0 0
  %83 = vmatpush1.bf16.msra.mxu0 %v67
  %84 = vmatprep.subr.bf16.mxu0 0
  %85 = vmatpush1.bf16.msra.mxu0 0
  %86 = vmatprep.subr.bf16.mxu0 0
  %87 = vmatpush1.bf16.msra.mxu0 0
  %88 = vmatprep.subr.bf16.mxu0 0
  %89 = vmatpush1.bf16.msra.mxu0 0
  %90 = vmatprep.subr.bf16.mxu0 0
  %91 = vmatpush1.bf16.msra.mxu0 0
  %92 = vmatprep.subr.bf16.mxu0 0
  %93 = vmatpush1.bf16.msra.mxu0 0
  %94 = vmatprep.subr.bf16.mxu0 0
  %95 = vmatpush1.bf16.msra.mxu0 0
  %96 = vmatprep.subr.bf16.mxu0 0
  %97 = vmatpush1.bf16.msra.mxu0 0
  %98 = vmatprep.subr.bf16.mxu0 0
  %99 = vmatpush1.bf16.msra.mxu0 0
  %100 = vmatprep.subr.bf16.mxu0 0
  %101 = vmatpush1.bf16.msra.mxu0 0
  %102 = vmatprep.subr.bf16.mxu0 0
  %103 = vmatpush1.bf16.msra.mxu0 0
  %104 = vmatprep.subr.bf16.mxu0 0
  %105 = vmatpush1.bf16.msra.mxu0 0
  %106 = vmatprep.subr.bf16.mxu0 0
  %107 = vmatpush1.bf16.msra.mxu0 0
  %108 = vmatprep.mubr.bf16.mxu0 0
  %109 = vmatmul.mubr.bf16.gmra.mrb[0].mxu0 %v74
  %v110 = vpop.f32.mrb[0].mxu0
  %v111 = vadd.f32 0.0, %v110
  %v112 = vpop.f32.mrb[0].mxu0
  %v113 = vpop.f32.mrb[0].mxu0
  %v114 = vadd.f32 0.0, %v113
  %v115 = vpop.f32.mrb[0].mxu0
  %116 = vdwg.mxu0
  %v117 = vadd.f32 %v31, %v111
  %v118 = vadd.f32 %v32, %v114
  %vm119 = vcmask 261120
  %120 = vst.msk [vmem:[#allocation2] sm:$0xff] %vm119, %v117
  %121 = vst.msk [vmem:[#allocation2 + $0x8] sm:$0xff] %vm119, %v118
  // Predicated region
  $region30: #{forward.17} parent=0 // pred_check
    %p122 = pneg %p24
  $region31: #{forward.17} parent=0 // pred_check_branch
    %124 = sbr.rel (%p122) target = $region33
  $region32: #{forward.17} parent=0 // pred_region
    %v125 = vld [vmem:[#allocation2] sm:$0xff]
    %v126 = vld [vmem:[#allocation2 + $0x8] sm:$0xff]
    %v127 = vld [vmem:[%s2] sm:$0x1]
    %v129 = vlaneseq
    %v130 = vshrl.u32 %v129, 7
    %v131 = vsub.s32 0, %v130
    %v132 = vrot.slane %v127, %v131
    %v134 = vadd.f32 %v125, %v132
    %v135 = vadd.f32 %v126, %v132
    %v136 = vld [vmem:[%s3] sm:$0xf]
    %v137 = vld [vmem:[%s3 + $0x4] sm:$0xf]
    %v138 = vunpack.c.l.bf16 %v136
    %v139 = vunpack.c.l.bf16 %v137
    %v140 = vadd.f32 %v134, %v138
    %v141 = vadd.f32 %v135, %v139
    %v142 = vsel %vm119, %v140, 0.0
    %143 = vadd.xlane.f32.xlu0 %v142
    %v144 = vpop.xlane.xlu0 %143
    %v145 = vsel %vm119, %v141, 0.0
    %146 = vadd.xlane.f32.xlu0 %v145
    %v147 = vpop.xlane.xlu0 %146
    %v148 = vrcp.pop 32.0
    %v149 = vmul.f32 %v144, %v148
    %v150 = vmul.f32 %v147, %v148
    %v151 = vsub.f32 %v140, %v149
    %v152 = vsub.f32 %v141, %v150
    %v153 = vmul.f32 %v151, %v151
    %v154 = vmul.f32 %v152, %v152
    %v155 = vsel %vm119, %v153, 0.0
    %156 = vadd.xlane.f32.xlu0 %v155
    %v157 = vpop.xlane.xlu0 %156
    %v158 = vsel %vm119, %v154, 0.0
    %159 = vadd.xlane.f32.xlu0 %v158
    %v160 = vpop.xlane.xlu0 %159
    %v161 = vmul.f32 %v157, %v148
    %v162 = vmul.f32 %v160, %v148
    %v163 = vadd.f32 %v161, 1e-12
    %v164 = vadd.f32 %v162, 1e-12
    %v165 = vrsqrt.pop %v163
    %v166 = vrsqrt.pop %v164
    %v167 = vmul.f32 %v151, %v165
    %v168 = vmul.f32 %v152, %v166
    %v169 = vld [vmem:[%s4] sm:$0x1]
    %v171 = vlaneseq
    %v172 = vshrl.u32 %v171, 7
    %v173 = vsub.s32 0, %v172
    %v174 = vrot.slane %v169, %v173
    %v176 = vmul.f32 %v167, %v174
    %v177 = vmul.f32 %v168, %v174
    %v178 = vld [vmem:[%s5] sm:$0x1]
    %v180 = vlaneseq
    %v181 = vshrl.u32 %v180, 7
    %v182 = vsub.s32 0, %v181
    %v183 = vrot.slane %v178, %v182
    %v185 = vadd.f32 %v176, %v183
    %v186 = vadd.f32 %v177, %v183
    %v187 = vpack.c.bf16 %v186, %v185
    %v189 = vunpack.c.l.b16 %v187
    %v190 = vunpack.c.h.b16 %v187
    %v191 = vpack.c.b16 %v189, %v189
    %v192 = vpack.c.b16 %v190, %v190
    %vm195 = vcmask 257024
    %196 = vst.msk [vmem:[%s6] sm:$0xf] %vm195, %v191
    %197 = vst.msk [vmem:[%s6 + $0x4] sm:$0xf] %vm195, %v192
  $region33: #{forward.17} parent=0 // pred_fallthru
    _
  // Predicated region
  $region34: #{forward.17} parent=0 // pred_check
    _
  $region35: #{forward.17} parent=0 // pred_check_branch
    %199 = sbr.rel (0) target = $region37
  $region36: #{forward.17} parent=0 // pred_region
    _
  $region37: #{forward.17} parent=0 // pred_fallthru
    _
  // Predicated region
  $region38: #{forward.17} parent=0 // pred_check
    _
  $region39: #{forward.17} parent=0 // pred_check_branch
    %201 = sbr.rel (0) target = $region41
  $region40: #{forward.17} parent=0 // pred_region
    _
  $region41: #{forward.17} parent=0 // pred_fallthru
    _

</llo_original>
